<compile_context>
chip_gen: v5e
topology: v5e:2x2
jax: 0.10.0
libtpu: 0.0.40
codegen_flags: <defaults>
</compile_context>

<pallas_src>
import functools

import jax
import jax.numpy as jnp
from jax.experimental import pallas as pl
from jax.experimental.pallas import tpu as pltpu


# ----------------------------- dimensions -----------------------------------
B = 2          # batch
C = 2          # context_num (sentences per sample)
S = 16         # max_seq_len   (multiple of 8 -> sublane aligned)
D = 128        # bert_feature_dim (lane aligned)
DS = 128       # sentence_representation_dim
DC = 128       # context_representation_dim
H = 128        # PW/PPH/IPH decoder hidden dim
NCLS = 2       # boundary / no-boundary
OUTP = 128     # lane-dense padding of NCLS in the kernel output
VOCAB = 100
MAX_LENGTH = 128
NUM_TASKS = 3  # PW, PPH, IPH
CS = C * S     # tokens per batch sample (matmul M dimension)
H3 = NUM_TASKS * H


# ----------------------------- fused kernel ----------------------------------
def fused_kernel(feat_ref, pe_ref, pool_ref, eexp_ref,
                 wc_ref, bc_ref, ws_ref, bs_ref, wx_ref, bx_ref,
                 wch_ref, wsx_ref, bh_ref, wo_ref, bo_ref,
                 out_ref):
    """One batch sample per grid step: positional encoding, multi-level
    encoder (character / sentence / context reps) and all 3 task heads."""
    # --- PositionalEncoding -------------------------------------------------
    x = feat_ref[0] + pe_ref[...]                                    # [CS, D]

    # --- MultiLevelEncoder --------------------------------------------------
    # character-level representation (M = CS tokens in one matmul)
    char = jnp.tanh(
        jnp.dot(x, wc_ref[...], preferred_element_type=jnp.float32)
        + bc_ref[...])                                               # [CS, D]

    # masked-mean sentence pooling via precomputed pooling matrix (mask/denom)
    pooled = jnp.dot(pool_ref[0], x,
                     preferred_element_type=jnp.float32)             # [C, D]
    sent = jnp.tanh(
        jnp.dot(pooled, ws_ref[...], preferred_element_type=jnp.float32)
        + bs_ref[...])                                               # [C, DS]

    # context representation: mean over the C sentence reps
    ctx_in = jnp.mean(sent, axis=0, keepdims=True)                   # [1, DS]
    ctx = jnp.tanh(
        jnp.dot(ctx_in, wx_ref[...], preferred_element_type=jnp.float32)
        + bx_ref[...])                                               # [1, DC]

    # --- MultiTaskLearningDecoder (PW | PPH | IPH stacked along N) ----------
    # per-sentence additive term for all 3 heads in ONE matmul (K = DS+DC)
    sc = jnp.concatenate([sent, jnp.broadcast_to(ctx, (C, DC))],
                         axis=1)                                     # [C, DS+DC]
    row_add = (jnp.dot(sc, wsx_ref[...], preferred_element_type=jnp.float32)
               + bh_ref[...])                                        # [C, 3H]

    # expand per-sentence term to per-token rows with a one-hot matmul
    h = (jnp.dot(char, wch_ref[...], preferred_element_type=jnp.float32)
         + jnp.dot(eexp_ref[...], row_add,
                   preferred_element_type=jnp.float32))              # [CS, 3H]
    h = jnp.maximum(h, 0.0)

    # block-diagonal output projection, NCLS padded to 128 lanes per task
    out_ref[0] = (jnp.dot(h, wo_ref[...], preferred_element_type=jnp.float32)
                  + bo_ref[...])                                     # [CS, 3*128]


# ------------------------------ wrapper ---------------------------------------
def _full_spec(shape):
    nd = len(shape)
    return pl.BlockSpec(shape, lambda b, _nd=nd: (0,) * _nd)


def run_fused(feat_flat, pe, pool, eexp,
              wc, bc, ws, bs, wx, bx, wch, wsx, bh, wo_big, bo_big):
    return pl.pallas_call(
        fused_kernel,
        out_shape=jax.ShapeDtypeStruct((B, CS, NUM_TASKS * OUTP), jnp.float32),
        grid=(B,),
        in_specs=[
            pl.BlockSpec((1, CS, D), lambda b: (b, 0, 0)),     # features
            _full_spec((CS, D)),                               # pos encoding
            pl.BlockSpec((1, C, CS), lambda b: (b, 0, 0)),     # pooling matrix
            _full_spec((CS, C)),                               # token expansion
            _full_spec((D, D)),   _full_spec((1, D)),          # wc, bc
            _full_spec((D, DS)),  _full_spec((1, DS)),         # ws, bs
            _full_spec((DS, DC)), _full_spec((1, DC)),         # wx, bx
            _full_spec((D, H3)),                               # wch (stacked)
            _full_spec((DS + DC, H3)),                         # wsx (stacked)
            _full_spec((1, H3)),                               # bh  (stacked)
            _full_spec((H3, NUM_TASKS * OUTP)),                # wo  (block-diag)
            _full_spec((1, NUM_TASKS * OUTP)),                 # bo  (padded)
        ],
        out_specs=pl.BlockSpec((1, CS, NUM_TASKS * OUTP), lambda b: (b, 0, 0)),
        compiler_params=pltpu.CompilerParams(
            dimension_semantics=("parallel",)),                # 2 TCs on v7x
    )(feat_flat, pe, pool, eexp,
      wc, bc, ws, bs, wx, bx, wch, wsx, bh, wo_big, bo_big)


# -------------------------- parameter construction ---------------------------
def sinusoidal_pe(max_len, dim):
    pos = jnp.arange(max_len, dtype=jnp.float32)[:, None]
    i = jnp.arange(dim // 2, dtype=jnp.float32)[None, :]
    angle = pos / jnp.power(10000.0, 2.0 * i / dim)
    pe = jnp.zeros((max_len, dim), jnp.float32)
    pe = pe.at[:, 0::2].set(jnp.sin(angle))
    pe = pe.at[:, 1::2].set(jnp.cos(angle))
    return pe


def make_params(key):
    ks = jax.random.split(key, 8)
    p = {}
    p["emb"] = jax.random.normal(ks[0], (VOCAB, D), jnp.float32) * 0.02
    p["wc"] = jax.random.normal(ks[1], (D, D), jnp.float32) * 0.02
    p["bc"] = jnp.zeros((1, D), jnp.float32)
    p["ws"] = jax.random.normal(ks[2], (D, DS), jnp.float32) * 0.02
    p["bs"] = jnp.zeros((1, DS), jnp.float32)
    p["wx"] = jax.random.normal(ks[3], (DS, DC), jnp.float32) * 0.02
    p["bx"] = jnp.zeros((1, DC), jnp.float32)
    # first decoder layer, 3 task heads stacked along N (PW | PPH | IPH)
    p["wch"] = jax.random.normal(ks[4], (D, H3), jnp.float32) * 0.02
    p["wsx"] = jax.random.normal(ks[5], (DS + DC, H3), jnp.float32) * 0.02
    p["bh"] = jnp.zeros((1, H3), jnp.float32)
    # second decoder layer: block-diagonal, NCLS padded to OUTP lanes per task
    wo = jax.random.normal(ks[6], (NUM_TASKS, H, NCLS), jnp.float32) * 0.02
    bo = jnp.zeros((NUM_TASKS, NCLS), jnp.float32)
    wo_big = jnp.zeros((H3, NUM_TASKS * OUTP), jnp.float32)
    bo_big = jnp.zeros((1, NUM_TASKS * OUTP), jnp.float32)
    for t in range(NUM_TASKS):
        wo_big = wo_big.at[t * H:(t + 1) * H,
                           t * OUTP:t * OUTP + NCLS].set(wo[t])
        bo_big = bo_big.at[0, t * OUTP:t * OUTP + NCLS].set(bo[t])
    p["wo_big"] = wo_big
    p["bo_big"] = bo_big
    # constants (precomputed once; no per-call sin/cos work)
    p["pe"] = jnp.tile(sinusoidal_pe(MAX_LENGTH, D)[:S], (C, 1))       # [CS, D]
    p["eexp"] = jnp.repeat(jnp.eye(C, dtype=jnp.float32), S, axis=0)   # [CS, C]
    return p


# ------------------------------- forward --------------------------------------
@functools.partial(jax.jit, static_argnames=("rank",))
def model_forward(batch_input_ids, params, rank=0):
    """batch_input_ids: int32 [B, C, S].  Returns (PW, PPH, IPH) logits,
    each [B, C, S, NCLS]."""
    del rank  # device placement arg in the torch reference; unused here

    # --- PretrainedLanguageModel (synthetic): embedding lookup + mask (glue) ---
    feat = params["emb"][batch_input_ids]                 # [B, C, S, D]
    mask = (batch_input_ids != 0).astype(jnp.float32)     # [B, C, S]

    feat_flat = feat.reshape(B, CS, D)

    # masked-mean pooling matrix: pool[b, c, c'*S+s] = mask[b,c,s]/denom[b,c]
    # if c' == c else 0  (XLA glue; avoids narrow mask tiles in the kernel)
    denom = jnp.maximum(jnp.sum(mask, axis=-1, keepdims=True), 1.0)   # [B,C,1]
    w = mask / denom                                                  # [B,C,S]
    pool = (w[:, :, None, :] *
            jnp.eye(C, dtype=jnp.float32)[None, :, :, None]).reshape(B, C, CS)

    # --- fused Pallas kernel: PE + MultiLevelEncoder + MultiTask decoder ---
    logits_full = run_fused(
        feat_flat, params["pe"], pool, params["eexp"],
        params["wc"], params["bc"], params["ws"], params["bs"],
        params["wx"], params["bx"], params["wch"], params["wsx"],
        params["bh"], params["wo_big"], params["bo_big"])
    # logits_full: [B, C*S, NUM_TASKS*128]  (lane-dense)

    logits = logits_full.reshape(B, C, S, NUM_TASKS, OUTP)[..., :NCLS]
    pw_logits = logits[:, :, :, 0, :]
    pph_logits = logits[:, :, :, 1, :]
    iph_logits = logits[:, :, :, 2, :]
    return pw_logits, pph_logits, iph_logits


# -------------------------------- main -----------------------------------------
if __name__ == "__main__":
    key = jax.random.PRNGKey(0)
    k_ids, k_params = jax.random.split(key)
    params = make_params(k_params)
    batch_input_ids = jax.random.randint(k_ids, (B, C, S), 1, VOCAB,
                                         dtype=jnp.int32)
    # pad the tail of every sequence with 0 (attention-masked)
    batch_input_ids = batch_input_ids.at[:, :, -4:].set(0)

    pw, pph, iph = model_forward(batch_input_ids, params, rank=0)
    jax.block_until_ready((pw, pph, iph))

    assert pw.shape == (B, C, S, NCLS)
    assert pph.shape == (B, C, S, NCLS)
    assert iph.shape == (B, C, S, NCLS)
    assert bool(jnp.all(jnp.isfinite(pw)))
    assert bool(jnp.all(jnp.isfinite(pph)))
    assert bool(jnp.all(jnp.isfinite(iph)))
    print("KERNEL_OK")
</pallas_src>

<mosaic_0001>
module attributes {stable_mosaic.version = 11 : i64} {
  func.func @fused_kernel(%arg0: i32, %arg1: memref<1x32x128xf32, #tpu.memory_space<vmem>>, %arg2: memref<32x128xf32, #tpu.memory_space<vmem>>, %arg3: memref<1x2x32xf32, #tpu.memory_space<vmem>>, %arg4: memref<32x2xf32, #tpu.memory_space<vmem>>, %arg5: memref<128x128xf32, #tpu.memory_space<vmem>>, %arg6: memref<1x128xf32, #tpu.memory_space<vmem>>, %arg7: memref<128x128xf32, #tpu.memory_space<vmem>>, %arg8: memref<1x128xf32, #tpu.memory_space<vmem>>, %arg9: memref<128x128xf32, #tpu.memory_space<vmem>>, %arg10: memref<1x128xf32, #tpu.memory_space<vmem>>, %arg11: memref<128x384xf32, #tpu.memory_space<vmem>>, %arg12: memref<256x384xf32, #tpu.memory_space<vmem>>, %arg13: memref<1x384xf32, #tpu.memory_space<vmem>>, %arg14: memref<384x384xf32, #tpu.memory_space<vmem>>, %arg15: memref<1x384xf32, #tpu.memory_space<vmem>>, %arg16: memref<1x32x384xf32, #tpu.memory_space<vmem>>) attributes {dimension_semantics = [#tpu.dimension_semantics<parallel>], iteration_bounds = array<i64: 2>, scalar_prefetch = 0 : i64, scratch_operands = 0 : i64, tpu.core_type = #tpu.core_type<tc>, window_params = [{transform_indices = @transform_0, window_bounds = array<i64: 1, 32, 128>}, {pipeline_mode = #tpu.pipeline_mode<synchronous>, transform_indices = @transform_1, window_bounds = array<i64: 32, 128>}, {transform_indices = @transform_2, window_bounds = array<i64: 1, 2, 32>}, {pipeline_mode = #tpu.pipeline_mode<synchronous>, transform_indices = @transform_3, window_bounds = array<i64: 32, 2>}, {pipeline_mode = #tpu.pipeline_mode<synchronous>, transform_indices = @transform_4, window_bounds = array<i64: 128, 128>}, {pipeline_mode = #tpu.pipeline_mode<synchronous>, transform_indices = @transform_5, window_bounds = array<i64: 1, 128>}, {pipeline_mode = #tpu.pipeline_mode<synchronous>, transform_indices = @transform_6, window_bounds = array<i64: 128, 128>}, {pipeline_mode = #tpu.pipeline_mode<synchronous>, transform_indices = @transform_7, window_bounds = array<i64: 1, 128>}, {pipeline_mode = #tpu.pipeline_mode<synchronous>, transform_indices = @transform_8, window_bounds = array<i64: 128, 128>}, {pipeline_mode = #tpu.pipeline_mode<synchronous>, transform_indices = @transform_9, window_bounds = array<i64: 1, 128>}, {pipeline_mode = #tpu.pipeline_mode<synchronous>, transform_indices = @transform_10, window_bounds = array<i64: 128, 384>}, {pipeline_mode = #tpu.pipeline_mode<synchronous>, transform_indices = @transform_11, window_bounds = array<i64: 256, 384>}, {pipeline_mode = #tpu.pipeline_mode<synchronous>, transform_indices = @transform_12, window_bounds = array<i64: 1, 384>}, {pipeline_mode = #tpu.pipeline_mode<synchronous>, transform_indices = @transform_13, window_bounds = array<i64: 384, 384>}, {pipeline_mode = #tpu.pipeline_mode<synchronous>, transform_indices = @transform_14, window_bounds = array<i64: 1, 384>}, {transform_indices = @transform_15, window_bounds = array<i64: 1, 32, 384>}]} {
    %c0 = arith.constant 0 : index
    %c0_0 = arith.constant 0 : index
    %c0_1 = arith.constant 0 : index
    %0 = vector.load %arg1[%c0, %c0_0, %c0_1] : memref<1x32x128xf32, #tpu.memory_space<vmem>>, vector<1x32x128xf32>
    %1 = vector.shape_cast %0 : vector<1x32x128xf32> to vector<32x128xf32>
    %c0_2 = arith.constant 0 : index
    %c0_3 = arith.constant 0 : index
    %2 = vector.load %arg2[%c0_2, %c0_3] : memref<32x128xf32, #tpu.memory_space<vmem>>, vector<32x128xf32>
    %3 = arith.addf %1, %2 : vector<32x128xf32>
    %c0_4 = arith.constant 0 : index
    %c0_5 = arith.constant 0 : index
    %4 = vector.load %arg5[%c0_4, %c0_5] : memref<128x128xf32, #tpu.memory_space<vmem>>, vector<128x128xf32>
    %cst = arith.constant dense<0.000000e+00> : vector<32x128xf32>
    %5 = tpu.matmul %3, %4, %cst {dimension_numbers = #tpu.dot_dimension_numbers<[1], [0], [0], [1], [0, 0, 1, 1], [], []>} : vector<32x128xf32>, vector<128x128xf32>, vector<32x128xf32> -> vector<32x128xf32>
    %c0_6 = arith.constant 0 : index
    %c0_7 = arith.constant 0 : index
    %6 = vector.load %arg6[%c0_6, %c0_7] : memref<1x128xf32, #tpu.memory_space<vmem>>, vector<1x128xf32>
    %7 = vector.broadcast %6 : vector<1x128xf32> to vector<32x128xf32>
    %8 = arith.addf %5, %7 : vector<32x128xf32>
    %9 = math.tanh %8 : vector<32x128xf32>
    %c0_8 = arith.constant 0 : index
    %c0_9 = arith.constant 0 : index
    %c0_10 = arith.constant 0 : index
    %10 = vector.load %arg3[%c0_8, %c0_9, %c0_10] : memref<1x2x32xf32, #tpu.memory_space<vmem>>, vector<1x2x32xf32>
    %11 = vector.shape_cast %10 : vector<1x2x32xf32> to vector<2x32xf32>
    %cst_11 = arith.constant dense<0.000000e+00> : vector<2x128xf32>
    %12 = tpu.matmul %11, %3, %cst_11 {dimension_numbers = #tpu.dot_dimension_numbers<[1], [0], [0], [1], [0, 0, 1, 1], [], []>} : vector<2x32xf32>, vector<32x128xf32>, vector<2x128xf32> -> vector<2x128xf32>
    %c0_12 = arith.constant 0 : index
    %c0_13 = arith.constant 0 : index
    %13 = vector.load %arg7[%c0_12, %c0_13] : memref<128x128xf32, #tpu.memory_space<vmem>>, vector<128x128xf32>
    %cst_14 = arith.constant dense<0.000000e+00> : vector<2x128xf32>
    %14 = tpu.matmul %12, %13, %cst_14 {dimension_numbers = #tpu.dot_dimension_numbers<[1], [0], [0], [1], [0, 0, 1, 1], [], []>} : vector<2x128xf32>, vector<128x128xf32>, vector<2x128xf32> -> vector<2x128xf32>
    %c0_15 = arith.constant 0 : index
    %c0_16 = arith.constant 0 : index
    %15 = vector.load %arg8[%c0_15, %c0_16] : memref<1x128xf32, #tpu.memory_space<vmem>>, vector<1x128xf32>
    %16 = vector.broadcast %15 : vector<1x128xf32> to vector<2x128xf32>
    %17 = arith.addf %14, %16 : vector<2x128xf32>
    %18 = math.tanh %17 : vector<2x128xf32>
    %cst_17 = arith.constant dense<0.000000e+00> : vector<128xf32>
    %19 = vector.multi_reduction <add>, %18, %cst_17 [0] : vector<2x128xf32> to vector<128xf32>
    %20 = vector.shape_cast %19 : vector<128xf32> to vector<1x128xf32>
    %cst_18 = arith.constant 2.000000e+00 : f32
    %21 = vector.broadcast %cst_18 : f32 to vector<1x128xf32>
    %22 = arith.divf %20, %21 : vector<1x128xf32>
    %c0_19 = arith.constant 0 : index
    %c0_20 = arith.constant 0 : index
    %23 = vector.load %arg9[%c0_19, %c0_20] : memref<128x128xf32, #tpu.memory_space<vmem>>, vector<128x128xf32>
    %cst_21 = arith.constant dense<0.000000e+00> : vector<1x128xf32>
    %24 = tpu.matmul %22, %23, %cst_21 {dimension_numbers = #tpu.dot_dimension_numbers<[1], [0], [0], [1], [0, 0, 1, 1], [], []>} : vector<1x128xf32>, vector<128x128xf32>, vector<1x128xf32> -> vector<1x128xf32>
    %c0_22 = arith.constant 0 : index
    %c0_23 = arith.constant 0 : index
    %25 = vector.load %arg10[%c0_22, %c0_23] : memref<1x128xf32, #tpu.memory_space<vmem>>, vector<1x128xf32>
    %26 = arith.addf %24, %25 : vector<1x128xf32>
    %27 = math.tanh %26 : vector<1x128xf32>
    %28 = vector.shape_cast %27 : vector<1x128xf32> to vector<1x128xf32>
    %29 = vector.broadcast %28 : vector<1x128xf32> to vector<2x128xf32>
    %30 = tpu.concatenate %18, %29 in 1 : vector<2x128xf32>, vector<2x128xf32> -> vector<2x256xf32>
    %c0_24 = arith.constant 0 : index
    %c0_25 = arith.constant 0 : index
    %31 = vector.load %arg12[%c0_24, %c0_25] : memref<256x384xf32, #tpu.memory_space<vmem>>, vector<256x384xf32>
    %cst_26 = arith.constant dense<0.000000e+00> : vector<2x384xf32>
    %32 = tpu.matmul %30, %31, %cst_26 {dimension_numbers = #tpu.dot_dimension_numbers<[1], [0], [0], [1], [0, 0, 1, 1], [], []>} : vector<2x256xf32>, vector<256x384xf32>, vector<2x384xf32> -> vector<2x384xf32>
    %c0_27 = arith.constant 0 : index
    %c0_28 = arith.constant 0 : index
    %33 = vector.load %arg13[%c0_27, %c0_28] : memref<1x384xf32, #tpu.memory_space<vmem>>, vector<1x384xf32>
    %34 = vector.broadcast %33 : vector<1x384xf32> to vector<2x384xf32>
    %35 = arith.addf %32, %34 : vector<2x384xf32>
    %c0_29 = arith.constant 0 : index
    %c0_30 = arith.constant 0 : index
    %36 = vector.load %arg11[%c0_29, %c0_30] : memref<128x384xf32, #tpu.memory_space<vmem>>, vector<128x384xf32>
    %cst_31 = arith.constant dense<0.000000e+00> : vector<32x384xf32>
    %37 = tpu.matmul %9, %36, %cst_31 {dimension_numbers = #tpu.dot_dimension_numbers<[1], [0], [0], [1], [0, 0, 1, 1], [], []>} : vector<32x128xf32>, vector<128x384xf32>, vector<32x384xf32> -> vector<32x384xf32>
    %c0_32 = arith.constant 0 : index
    %c0_33 = arith.constant 0 : index
    %38 = vector.load %arg4[%c0_32, %c0_33] : memref<32x2xf32, #tpu.memory_space<vmem>>, vector<32x2xf32>
    %cst_34 = arith.constant dense<0.000000e+00> : vector<32x384xf32>
    %39 = tpu.matmul %38, %35, %cst_34 {dimension_numbers = #tpu.dot_dimension_numbers<[1], [0], [0], [1], [0, 0, 1, 1], [], []>} : vector<32x2xf32>, vector<2x384xf32>, vector<32x384xf32> -> vector<32x384xf32>
    %40 = arith.addf %37, %39 : vector<32x384xf32>
    %cst_35 = arith.constant 0.000000e+00 : f32
    %41 = vector.broadcast %cst_35 : f32 to vector<32x384xf32>
    %42 = arith.maximumf %40, %41 : vector<32x384xf32>
    %c0_36 = arith.constant 0 : index
    %c0_37 = arith.constant 0 : index
    %43 = vector.load %arg14[%c0_36, %c0_37] : memref<384x384xf32, #tpu.memory_space<vmem>>, vector<384x384xf32>
    %cst_38 = arith.constant dense<0.000000e+00> : vector<32x384xf32>
    %44 = tpu.matmul %42, %43, %cst_38 {dimension_numbers = #tpu.dot_dimension_numbers<[1], [0], [0], [1], [0, 0, 1, 1], [], []>} : vector<32x384xf32>, vector<384x384xf32>, vector<32x384xf32> -> vector<32x384xf32>
    %c0_39 = arith.constant 0 : index
    %c0_40 = arith.constant 0 : index
    %45 = vector.load %arg15[%c0_39, %c0_40] : memref<1x384xf32, #tpu.memory_space<vmem>>, vector<1x384xf32>
    %46 = vector.broadcast %45 : vector<1x384xf32> to vector<32x384xf32>
    %47 = arith.addf %44, %46 : vector<32x384xf32>
    %c0_41 = arith.constant 0 : index
    %c0_42 = arith.constant 0 : index
    %c0_43 = arith.constant 0 : index
    %48 = vector.load %arg16[%c0_41, %c0_42, %c0_43] : memref<1x32x384xf32, #tpu.memory_space<vmem>>, vector<1x32x384xf32>
    %49 = vector.shape_cast %48 : vector<1x32x384xf32> to vector<32x384xf32>
    %50 = vector.shape_cast %47 : vector<32x384xf32> to vector<1x32x384xf32>
    tpu.vector_store %arg16[%c0_41, %c0_42, %c0_43], %50 {strides = array<i32>} : memref<1x32x384xf32, #tpu.memory_space<vmem>>, vector<1x32x384xf32>,
    return
  }
  func.func @transform_0(%arg0: i32) -> (i32, i32, i32) {
    %c0_i32 = arith.constant 0 : i32
    %c0_i32_0 = arith.constant 0 : i32
    %c0_i32_1 = arith.constant 0 : i32
    return %arg0, %c0_i32, %c0_i32_0 : i32, i32, i32
  }
  func.func @transform_1(%arg0: i32) -> (i32, i32) {
    %c0_i32 = arith.constant 0 : i32
    %c0_i32_0 = arith.constant 0 : i32
    %c0_i32_1 = arith.constant 0 : i32
    return %c0_i32, %c0_i32_0 : i32, i32
  }
  func.func @transform_2(%arg0: i32) -> (i32, i32, i32) {
    %c0_i32 = arith.constant 0 : i32
    %c0_i32_0 = arith.constant 0 : i32
    %c0_i32_1 = arith.constant 0 : i32
    return %arg0, %c0_i32, %c0_i32_0 : i32, i32, i32
  }
  func.func @transform_3(%arg0: i32) -> (i32, i32) {
    %c0_i32 = arith.constant 0 : i32
    %c0_i32_0 = arith.constant 0 : i32
    %c0_i32_1 = arith.constant 0 : i32
    return %c0_i32, %c0_i32_0 : i32, i32
  }
  func.func @transform_4(%arg0: i32) -> (i32, i32) {
    %c0_i32 = arith.constant 0 : i32
    %c0_i32_0 = arith.constant 0 : i32
    %c0_i32_1 = arith.constant 0 : i32
    return %c0_i32, %c0_i32_0 : i32, i32
  }
  func.func @transform_5(%arg0: i32) -> (i32, i32) {
    %c0_i32 = arith.constant 0 : i32
    %c0_i32_0 = arith.constant 0 : i32
    %c0_i32_1 = arith.constant 0 : i32
    return %c0_i32, %c0_i32_0 : i32, i32
  }
  func.func @transform_6(%arg0: i32) -> (i32, i32) {
    %c0_i32 = arith.constant 0 : i32
    %c0_i32_0 = arith.constant 0 : i32
    %c0_i32_1 = arith.constant 0 : i32
    return %c0_i32, %c0_i32_0 : i32, i32
  }
  func.func @transform_7(%arg0: i32) -> (i32, i32) {
    %c0_i32 = arith.constant 0 : i32
    %c0_i32_0 = arith.constant 0 : i32
    %c0_i32_1 = arith.constant 0 : i32
    return %c0_i32, %c0_i32_0 : i32, i32
  }
  func.func @transform_8(%arg0: i32) -> (i32, i32) {
    %c0_i32 = arith.constant 0 : i32
    %c0_i32_0 = arith.constant 0 : i32
    %c0_i32_1 = arith.constant 0 : i32
    return %c0_i32, %c0_i32_0 : i32, i32
  }
  func.func @transform_9(%arg0: i32) -> (i32, i32) {
    %c0_i32 = arith.constant 0 : i32
    %c0_i32_0 = arith.constant 0 : i32
    %c0_i32_1 = arith.constant 0 : i32
    return %c0_i32, %c0_i32_0 : i32, i32
  }
  func.func @transform_10(%arg0: i32) -> (i32, i32) {
    %c0_i32 = arith.constant 0 : i32
    %c0_i32_0 = arith.constant 0 : i32
    %c0_i32_1 = arith.constant 0 : i32
    return %c0_i32, %c0_i32_0 : i32, i32
  }
  func.func @transform_11(%arg0: i32) -> (i32, i32) {
    %c0_i32 = arith.constant 0 : i32
    %c0_i32_0 = arith.constant 0 : i32
    %c0_i32_1 = arith.constant 0 : i32
    return %c0_i32, %c0_i32_0 : i32, i32
  }
  func.func @transform_12(%arg0: i32) -> (i32, i32) {
    %c0_i32 = arith.constant 0 : i32
    %c0_i32_0 = arith.constant 0 : i32
    %c0_i32_1 = arith.constant 0 : i32
    return %c0_i32, %c0_i32_0 : i32, i32
  }
  func.func @transform_13(%arg0: i32) -> (i32, i32) {
    %c0_i32 = arith.constant 0 : i32
    %c0_i32_0 = arith.constant 0 : i32
    %c0_i32_1 = arith.constant 0 : i32
    return %c0_i32, %c0_i32_0 : i32, i32
  }
  func.func @transform_14(%arg0: i32) -> (i32, i32) {
    %c0_i32 = arith.constant 0 : i32
    %c0_i32_0 = arith.constant 0 : i32
    %c0_i32_1 = arith.constant 0 : i32
    return %c0_i32, %c0_i32_0 : i32, i32
  }
  func.func @transform_15(%arg0: i32) -> (i32, i32, i32) {
    %c0_i32 = arith.constant 0 : i32
    %c0_i32_0 = arith.constant 0 : i32
    %c0_i32_1 = arith.constant 0 : i32
    return %arg0, %c0_i32, %c0_i32_0 : i32, i32, i32
  }
}

</mosaic_0001>

<llo_original>
// kernel: model_forward.1
$region0: #{model_forward.1}
  #allocation0 [shape = 'u32[]', space=smem, size = 0x4, offset = 0x4, fixed_abs, tag = 'smem constant byte address 0x4 - core index']
  #allocation1 [shape = 'u32[72,128]{1,0:T(1,128)}', space=vmem, size = 0x9000, scoped, tag = 'internal scratch']
  %s0 = inlined_call_operand.vmem [shape: f32[2,32,128], index: 0, kind: input, shape index: {}]
  %s1 = inlined_call_operand.vmem [shape: f32[32,128], index: 1, kind: input, shape index: {}]
  %s2 = inlined_call_operand.vmem [shape: f32[2,2,32], index: 2, kind: input, shape index: {}]
  %s3 = inlined_call_operand.vmem [shape: f32[32,2], index: 3, kind: input, shape index: {}]
  %s4 = inlined_call_operand.vmem [shape: f32[128,128], index: 4, kind: input, shape index: {}]
  %s5 = inlined_call_operand.vmem [shape: f32[1,128], index: 5, kind: input, shape index: {}]
  %s6 = inlined_call_operand.hbm [shape: f32[128,128], index: 6, kind: input, shape index: {}]
  %s7 = inlined_call_operand.vmem [shape: f32[1,128], index: 7, kind: input, shape index: {}]
  %s8 = inlined_call_operand.hbm [shape: f32[128,128], index: 8, kind: input, shape index: {}]
  %s9 = inlined_call_operand.vmem [shape: f32[1,128], index: 9, kind: input, shape index: {}]
  %s10 = inlined_call_operand.vmem [shape: f32[128,384], index: 10, kind: input, shape index: {}]
  %s11 = inlined_call_operand.hbm [shape: f32[256,384], index: 11, kind: input, shape index: {}]
  %s12 = inlined_call_operand.vmem [shape: f32[1,384], index: 12, kind: input, shape index: {}]
  %s13 = inlined_call_operand.hbm [shape: f32[384,384], index: 13, kind: input, shape index: {}]
  %s14 = inlined_call_operand.vmem [shape: f32[1,384], index: 14, kind: input, shape index: {}]
  %s15 = inlined_call_operand.vmem [shape: f32[2,32,384], index: 15, kind: output, shape index: {}]
  %s16 = sld [smem:[#allocation0]]
  $region109: #{model_forward.1} parent=0
    _
  %s18 = ssub.s32 1, %s16
  %s19 = scalar_select 0, %s18, %s16
  $region1: #{model_forward.1} parent=0
    #allocation2 [shape = 'u8[65536]{0}', space=vmem, size = 0x10000, scoped, tag = 'input window, operand 6, single buffered']
    #allocation3 [shape = 's32[2]{0}', space=sflag, size = 0x8, scoped, tag = 'scoped memory for model_forward.1']
    #allocation4 [shape = 'u8[65536]{0}', space=vmem, size = 0x10000, scoped, tag = 'input window, operand 8, single buffered']
    #allocation5 [shape = 's32[1]{0}', space=sflag, size = 0x4, scoped, tag = 'scoped memory for model_forward.1']
    #allocation6 [shape = 'u8[393216]{0}', space=vmem, size = 0x60000, scoped, tag = 'input window, operand 11, single buffered']
    #allocation7 [shape = 'u8[589824]{0}', space=vmem, size = 0x90000, scoped, tag = 'input window, operand 13, single buffered']
    #allocation8 [shape = 's32[1]{0}', space=sflag, size = 0x4, scoped, tag = 'scoped memory for model_forward.1']
    %20 = vsyncpa [#allocation3], 0
    %21 = vsyncpa [#allocation5], 0
    %22 = vsyncpa [#allocation8], 0
    loop: start=0, step=1, limit=4
    $region2: #{model_forward.1} parent=1 // loop_pre_header
      _
    $region3: #{model_forward.1} parent=1 // loop_header
      %s24 = sphi 0, %s28
      %p25 = scmp.ge.s32.totalorder %s24, 4
      %s34 = sphi 0, %s36
      %s37 = sphi 0, %s34
      %s38 = sphi 0, %s37
      %s54 = sphi 0, %s38
      %s58 = sphi 0, %s58
      %s60 = sphi 0, %s58
      %s61 = sphi 0, %s60
      %s75 = sphi 0, %s61
      %s81 = sphi 0, %s83
      %s84 = sphi 0, %s81
      %s85 = sphi 0, %s84
      %s101 = sphi 0, %s85
      %s105 = sphi 0, %s105
      %s107 = sphi 0, %s105
      %s108 = sphi 0, %s107
      %s122 = sphi 0, %s108
      %s126 = sphi 0, %s126
      %s128 = sphi 0, %s126
      %s129 = sphi 0, %s128
      %s143 = sphi 0, %s129
      %s147 = sphi 0, %s147
      %s149 = sphi 0, %s147
      %s150 = sphi 0, %s149
      %s164 = sphi 0, %s150
      %s168 = sphi 0, %s168
      %s170 = sphi 0, %s168
      %s171 = sphi 0, %s170
      %s185 = sphi 0, %s171
      %s189 = sphi 0, %s189
      %s191 = sphi 0, %s189
      %s192 = sphi 0, %s191
      %s206 = sphi 0, %s192
      %s210 = sphi 0, %s210
      %s212 = sphi 0, %s210
      %s213 = sphi 0, %s212
      %s227 = sphi 0, %s213
      %s231 = sphi 0, %s231
      %s233 = sphi 0, %s231
      %s234 = sphi 0, %s233
      %s248 = sphi 0, %s234
      %s252 = sphi 0, %s252
      %s254 = sphi 0, %s252
      %s255 = sphi 0, %s254
      %s269 = sphi 0, %s255
      %s273 = sphi 0, %s273
      %s275 = sphi 0, %s273
      %s276 = sphi 0, %s275
      %s290 = sphi 0, %s276
      %s294 = sphi 0, %s294
      %s296 = sphi 0, %s294
      %s297 = sphi 0, %s296
      %s311 = sphi 0, %s297
      %s315 = sphi 0, %s315
      %s317 = sphi 0, %s315
      %s318 = sphi 0, %s317
      %s332 = sphi 0, %s318
      %s336 = sphi 0, %s336
      %s338 = sphi 0, %s336
      %s339 = sphi 0, %s338
      %s353 = sphi 0, %s339
      %s359 = sphi 0, %s361
      %s362 = sphi 0, %s359
      %s363 = sphi 0, %s362
      %s379 = sphi 0, %s363
    $region4: #{model_forward.1} parent=1 // loop_header_branch
      %27 = sbr.rel (%p25) target = $region8
    $region5: #{model_forward.1} parent=1 // loop_body
      %s29 = ssub.s32 %s24, 1
      %s30 = ssub.s32 %s24, 2
      %s31 = sadd.s32 %s24, 1
      %s32 = ssub.s32 %s24, %s31
      %p33 = scmp.eq.s32.totalorder %s32, 0
      %s35 = sadd.s32 %s34, 1
      %s36 = scalar_select %p33, %s34, %s35
      %p39 = pneg %p33
      %p40 = scmp.eq.s32.totalorder %s24, 1
      %p41 = por %p39, %p40
      %p42 = scmp.ne.s32.totalorder %s34, %s37
      %p43 = scmp.eq.s32.totalorder %s24, 0
      %p44 = por %p42, %p43
      %p45 = scmp.ne.s32.totalorder %s34, %s37
      %p46 = scmp.eq.s32.totalorder %s29, 1
      %p47 = por %p45, %p46
      %p48 = scmp.ne.s32.totalorder %s37, %s38
      %p49 = scmp.eq.s32.totalorder %s29, 0
      %p50 = por %p48, %p49
      %p51 = scmp.ne.s32.totalorder %s37, %s38
      %p52 = scmp.eq.s32.totalorder %s30, 1
      %p53 = por %p51, %p52
      %p55 = scmp.ne.s32.totalorder %s38, %s54
      %p56 = scmp.eq.s32.totalorder %s30, 0
      %p57 = por %p55, %p56
      %s59 = sadd.s32 %s58, 1
      %p62 = scmp.eq.s32.totalorder %s24, 1
      %p63 = scmp.ne.s32.totalorder %s58, %s60
      %p64 = scmp.eq.s32.totalorder %s24, 0
      %p65 = por %p63, %p64
      %p66 = scmp.ne.s32.totalorder %s58, %s60
      %p67 = scmp.eq.s32.totalorder %s29, 1
      %p68 = por %p66, %p67
      %p69 = scmp.ne.s32.totalorder %s60, %s61
      %p70 = scmp.eq.s32.totalorder %s29, 0
      %p71 = por %p69, %p70
      %p72 = scmp.ne.s32.totalorder %s60, %s61
      %p73 = scmp.eq.s32.totalorder %s30, 1
      %p74 = por %p72, %p73
      %p76 = scmp.ne.s32.totalorder %s61, %s75
      %p77 = scmp.eq.s32.totalorder %s30, 0
      %p78 = por %p76, %p77
      %s79 = ssub.s32 %s24, %s31
      %p80 = scmp.eq.s32.totalorder %s79, 0
      %s82 = sadd.s32 %s81, 1
      %s83 = scalar_select %p80, %s81, %s82
      %p86 = pneg %p80
      %p87 = scmp.eq.s32.totalorder %s24, 1
      %p88 = por %p86, %p87
      %p89 = scmp.ne.s32.totalorder %s81, %s84
      %p90 = scmp.eq.s32.totalorder %s24, 0
      %p91 = por %p89, %p90
      %p92 = scmp.ne.s32.totalorder %s81, %s84
      %p93 = scmp.eq.s32.totalorder %s29, 1
      %p94 = por %p92, %p93
      %p95 = scmp.ne.s32.totalorder %s84, %s85
      %p96 = scmp.eq.s32.totalorder %s29, 0
      %p97 = por %p95, %p96
      %p98 = scmp.ne.s32.totalorder %s84, %s85
      %p99 = scmp.eq.s32.totalorder %s30, 1
      %p100 = por %p98, %p99
      %p102 = scmp.ne.s32.totalorder %s85, %s101
      %p103 = scmp.eq.s32.totalorder %s30, 0
      %p104 = por %p102, %p103
      %s106 = sadd.s32 %s105, 1
      %p109 = scmp.eq.s32.totalorder %s24, 1
      %p110 = scmp.ne.s32.totalorder %s105, %s107
      %p111 = scmp.eq.s32.totalorder %s24, 0
      %p112 = por %p110, %p111
      %p113 = scmp.ne.s32.totalorder %s105, %s107
      %p114 = scmp.eq.s32.totalorder %s29, 1
      %p115 = por %p113, %p114
      %p116 = scmp.ne.s32.totalorder %s107, %s108
      %p117 = scmp.eq.s32.totalorder %s29, 0
      %p118 = por %p116, %p117
      %p119 = scmp.ne.s32.totalorder %s107, %s108
      %p120 = scmp.eq.s32.totalorder %s30, 1
      %p121 = por %p119, %p120
      %p123 = scmp.ne.s32.totalorder %s108, %s122
      %p124 = scmp.eq.s32.totalorder %s30, 0
      %p125 = por %p123, %p124
      %s127 = sadd.s32 %s126, 1
      %p130 = scmp.eq.s32.totalorder %s24, 1
      %p131 = scmp.ne.s32.totalorder %s126, %s128
      %p132 = scmp.eq.s32.totalorder %s24, 0
      %p133 = por %p131, %p132
      %p134 = scmp.ne.s32.totalorder %s126, %s128
      %p135 = scmp.eq.s32.totalorder %s29, 1
      %p136 = por %p134, %p135
      %p137 = scmp.ne.s32.totalorder %s128, %s129
      %p138 = scmp.eq.s32.totalorder %s29, 0
      %p139 = por %p137, %p138
      %p140 = scmp.ne.s32.totalorder %s128, %s129
      %p141 = scmp.eq.s32.totalorder %s30, 1
      %p142 = por %p140, %p141
      %p144 = scmp.ne.s32.totalorder %s129, %s143
      %p145 = scmp.eq.s32.totalorder %s30, 0
      %p146 = por %p144, %p145
      %s148 = sadd.s32 %s147, 1
      %p151 = scmp.eq.s32.totalorder %s24, 1
      %p152 = scmp.ne.s32.totalorder %s147, %s149
      %p153 = scmp.eq.s32.totalorder %s24, 0
      %p154 = por %p152, %p153
      %p155 = scmp.ne.s32.totalorder %s147, %s149
      %p156 = scmp.eq.s32.totalorder %s29, 1
      %p157 = por %p155, %p156
      %p158 = scmp.ne.s32.totalorder %s149, %s150
      %p159 = scmp.eq.s32.totalorder %s29, 0
      %p160 = por %p158, %p159
      %p161 = scmp.ne.s32.totalorder %s149, %s150
      %p162 = scmp.eq.s32.totalorder %s30, 1
      %p163 = por %p161, %p162
      %p165 = scmp.ne.s32.totalorder %s150, %s164
      %p166 = scmp.eq.s32.totalorder %s30, 0
      %p167 = por %p165, %p166
      %s169 = sadd.s32 %s168, 1
      %p172 = scmp.eq.s32.totalorder %s24, 1
      %p173 = scmp.ne.s32.totalorder %s168, %s170
      %p174 = scmp.eq.s32.totalorder %s24, 0
      %p175 = por %p173, %p174
      %p176 = scmp.ne.s32.totalorder %s168, %s170
      %p177 = scmp.eq.s32.totalorder %s29, 1
      %p178 = por %p176, %p177
      %p179 = scmp.ne.s32.totalorder %s170, %s171
      %p180 = scmp.eq.s32.totalorder %s29, 0
      %p181 = por %p179, %p180
      %p182 = scmp.ne.s32.totalorder %s170, %s171
      %p183 = scmp.eq.s32.totalorder %s30, 1
      %p184 = por %p182, %p183
      %p186 = scmp.ne.s32.totalorder %s171, %s185
      %p187 = scmp.eq.s32.totalorder %s30, 0
      %p188 = por %p186, %p187
      %s190 = sadd.s32 %s189, 1
      %p193 = scmp.eq.s32.totalorder %s24, 1
      %p194 = scmp.ne.s32.totalorder %s189, %s191
      %p195 = scmp.eq.s32.totalorder %s24, 0
      %p196 = por %p194, %p195
      %p197 = scmp.ne.s32.totalorder %s189, %s191
      %p198 = scmp.eq.s32.totalorder %s29, 1
      %p199 = por %p197, %p198
      %p200 = scmp.ne.s32.totalorder %s191, %s192
      %p201 = scmp.eq.s32.totalorder %s29, 0
      %p202 = por %p200, %p201
      %p203 = scmp.ne.s32.totalorder %s191, %s192
      %p204 = scmp.eq.s32.totalorder %s30, 1
      %p205 = por %p203, %p204
      %p207 = scmp.ne.s32.totalorder %s192, %s206
      %p208 = scmp.eq.s32.totalorder %s30, 0
      %p209 = por %p207, %p208
      %s211 = sadd.s32 %s210, 1
      %p214 = scmp.eq.s32.totalorder %s24, 1
      %p215 = scmp.ne.s32.totalorder %s210, %s212
      %p216 = scmp.eq.s32.totalorder %s24, 0
      %p217 = por %p215, %p216
      %p218 = scmp.ne.s32.totalorder %s210, %s212
      %p219 = scmp.eq.s32.totalorder %s29, 1
      %p220 = por %p218, %p219
      %p221 = scmp.ne.s32.totalorder %s212, %s213
      %p222 = scmp.eq.s32.totalorder %s29, 0
      %p223 = por %p221, %p222
      %p224 = scmp.ne.s32.totalorder %s212, %s213
      %p225 = scmp.eq.s32.totalorder %s30, 1
      %p226 = por %p224, %p225
      %p228 = scmp.ne.s32.totalorder %s213, %s227
      %p229 = scmp.eq.s32.totalorder %s30, 0
      %p230 = por %p228, %p229
      %s232 = sadd.s32 %s231, 1
      %p235 = scmp.eq.s32.totalorder %s24, 1
      %p236 = scmp.ne.s32.totalorder %s231, %s233
      %p237 = scmp.eq.s32.totalorder %s24, 0
      %p238 = por %p236, %p237
      %p239 = scmp.ne.s32.totalorder %s231, %s233
      %p240 = scmp.eq.s32.totalorder %s29, 1
      %p241 = por %p239, %p240
      %p242 = scmp.ne.s32.totalorder %s233, %s234
      %p243 = scmp.eq.s32.totalorder %s29, 0
      %p244 = por %p242, %p243
      %p245 = scmp.ne.s32.totalorder %s233, %s234
      %p246 = scmp.eq.s32.totalorder %s30, 1
      %p247 = por %p245, %p246
      %p249 = scmp.ne.s32.totalorder %s234, %s248
      %p250 = scmp.eq.s32.totalorder %s30, 0
      %p251 = por %p249, %p250
      %s253 = sadd.s32 %s252, 1
      %p256 = scmp.eq.s32.totalorder %s24, 1
      %p257 = scmp.ne.s32.totalorder %s252, %s254
      %p258 = scmp.eq.s32.totalorder %s24, 0
      %p259 = por %p257, %p258
      %p260 = scmp.ne.s32.totalorder %s252, %s254
      %p261 = scmp.eq.s32.totalorder %s29, 1
      %p262 = por %p260, %p261
      %p263 = scmp.ne.s32.totalorder %s254, %s255
      %p264 = scmp.eq.s32.totalorder %s29, 0
      %p265 = por %p263, %p264
      %p266 = scmp.ne.s32.totalorder %s254, %s255
      %p267 = scmp.eq.s32.totalorder %s30, 1
      %p268 = por %p266, %p267
      %p270 = scmp.ne.s32.totalorder %s255, %s269
      %p271 = scmp.eq.s32.totalorder %s30, 0
      %p272 = por %p270, %p271
      %s274 = sadd.s32 %s273, 1
      %p277 = scmp.eq.s32.totalorder %s24, 1
      %p278 = scmp.ne.s32.totalorder %s273, %s275
      %p279 = scmp.eq.s32.totalorder %s24, 0
      %p280 = por %p278, %p279
      %p281 = scmp.ne.s32.totalorder %s273, %s275
      %p282 = scmp.eq.s32.totalorder %s29, 1
      %p283 = por %p281, %p282
      %p284 = scmp.ne.s32.totalorder %s275, %s276
      %p285 = scmp.eq.s32.totalorder %s29, 0
      %p286 = por %p284, %p285
      %p287 = scmp.ne.s32.totalorder %s275, %s276
      %p288 = scmp.eq.s32.totalorder %s30, 1
      %p289 = por %p287, %p288
      %p291 = scmp.ne.s32.totalorder %s276, %s290
      %p292 = scmp.eq.s32.totalorder %s30, 0
      %p293 = por %p291, %p292
      %s295 = sadd.s32 %s294, 1
      %p298 = scmp.eq.s32.totalorder %s24, 1
      %p299 = scmp.ne.s32.totalorder %s294, %s296
      %p300 = scmp.eq.s32.totalorder %s24, 0
      %p301 = por %p299, %p300
      %p302 = scmp.ne.s32.totalorder %s294, %s296
      %p303 = scmp.eq.s32.totalorder %s29, 1
      %p304 = por %p302, %p303
      %p305 = scmp.ne.s32.totalorder %s296, %s297
      %p306 = scmp.eq.s32.totalorder %s29, 0
      %p307 = por %p305, %p306
      %p308 = scmp.ne.s32.totalorder %s296, %s297
      %p309 = scmp.eq.s32.totalorder %s30, 1
      %p310 = por %p308, %p309
      %p312 = scmp.ne.s32.totalorder %s297, %s311
      %p313 = scmp.eq.s32.totalorder %s30, 0
      %p314 = por %p312, %p313
      %s316 = sadd.s32 %s315, 1
      %p319 = scmp.eq.s32.totalorder %s24, 1
      %p320 = scmp.ne.s32.totalorder %s315, %s317
      %p321 = scmp.eq.s32.totalorder %s24, 0
      %p322 = por %p320, %p321
      %p323 = scmp.ne.s32.totalorder %s315, %s317
      %p324 = scmp.eq.s32.totalorder %s29, 1
      %p325 = por %p323, %p324
      %p326 = scmp.ne.s32.totalorder %s317, %s318
      %p327 = scmp.eq.s32.totalorder %s29, 0
      %p328 = por %p326, %p327
      %p329 = scmp.ne.s32.totalorder %s317, %s318
      %p330 = scmp.eq.s32.totalorder %s30, 1
      %p331 = por %p329, %p330
      %p333 = scmp.ne.s32.totalorder %s318, %s332
      %p334 = scmp.eq.s32.totalorder %s30, 0
      %p335 = por %p333, %p334
      %s337 = sadd.s32 %s336, 1
      %p340 = scmp.eq.s32.totalorder %s24, 1
      %p341 = scmp.ne.s32.totalorder %s336, %s338
      %p342 = scmp.eq.s32.totalorder %s24, 0
      %p343 = por %p341, %p342
      %p344 = scmp.ne.s32.totalorder %s336, %s338
      %p345 = scmp.eq.s32.totalorder %s29, 1
      %p346 = por %p344, %p345
      %p347 = scmp.ne.s32.totalorder %s338, %s339
      %p348 = scmp.eq.s32.totalorder %s29, 0
      %p349 = por %p347, %p348
      %p350 = scmp.ne.s32.totalorder %s338, %s339
      %p351 = scmp.eq.s32.totalorder %s30, 1
      %p352 = por %p350, %p351
      %p354 = scmp.ne.s32.totalorder %s339, %s353
      %p355 = scmp.eq.s32.totalorder %s30, 0
      %p356 = por %p354, %p355
      %s357 = ssub.s32 %s24, %s31
      %p358 = scmp.eq.s32.totalorder %s357, 0
      %s360 = sadd.s32 %s359, 1
      %s361 = scalar_select %p358, %s359, %s360
      %p364 = pneg %p358
      %p365 = scmp.eq.s32.totalorder %s24, 1
      %p366 = por %p364, %p365
      %p367 = scmp.ne.s32.totalorder %s359, %s362
      %p368 = scmp.eq.s32.totalorder %s24, 0
      %p369 = por %p367, %p368
      %p370 = scmp.ne.s32.totalorder %s359, %s362
      %p371 = scmp.eq.s32.totalorder %s29, 1
      %p372 = por %p370, %p371
      %p373 = scmp.ne.s32.totalorder %s362, %s363
      %p374 = scmp.eq.s32.totalorder %s29, 0
      %p375 = por %p373, %p374
      %p376 = scmp.ne.s32.totalorder %s362, %s363
      %p377 = scmp.eq.s32.totalorder %s30, 1
      %p378 = por %p376, %p377
      %p380 = scmp.ne.s32.totalorder %s363, %s379
      %p381 = scmp.eq.s32.totalorder %s30, 0
      %p382 = por %p380, %p381
      %p383 = scmp.le.s32.totalorder 1, %s24
      %p384 = scmp.lt.s32.totalorder %s24, 3
      %p385 = pnand %p383, %p384
      %p386 = pneg %p385
      // Predicated region
      $region9: #{model_forward.1} parent=5 // pred_check
        _
      $region10: #{model_forward.1} parent=5 // pred_check_branch
        %388 = sbr.rel (%p385) target = $region12
      $region11: #{model_forward.1} parent=5 // pred_region
        %s389 = ssub.s32 %s24, 1
        // Predicated region
        $region13: #{model_forward.1} parent=11 // pred_check
          %p390 = pneg %p71
        $region14: #{model_forward.1} parent=11 // pred_check_branch
          %392 = sbr.rel (%p390) target = $region16
        $region15: #{model_forward.1} parent=11 // pred_region
          _
        $region16: #{model_forward.1} parent=11 // pred_fallthru
          _
        // Predicated region
        $region17: #{model_forward.1} parent=11 // pred_check
          %p393 = pneg %p118
        $region18: #{model_forward.1} parent=11 // pred_check_branch
          %395 = sbr.rel (%p393) target = $region20
        $region19: #{model_forward.1} parent=11 // pred_region
          _
        $region20: #{model_forward.1} parent=11 // pred_fallthru
          _
        // Predicated region
        $region21: #{model_forward.1} parent=11 // pred_check
          %p396 = pneg %p139
        $region22: #{model_forward.1} parent=11 // pred_check_branch
          %398 = sbr.rel (%p396) target = $region24
        $region23: #{model_forward.1} parent=11 // pred_region
          _
        $region24: #{model_forward.1} parent=11 // pred_fallthru
          _
        // Predicated region
        $region25: #{model_forward.1} parent=11 // pred_check
          %p399 = pneg %p160
        $region26: #{model_forward.1} parent=11 // pred_check_branch
          %401 = sbr.rel (%p399) target = $region28
        $region27: #{model_forward.1} parent=11 // pred_region
          _
        $region28: #{model_forward.1} parent=11 // pred_fallthru
          _
        // Predicated region
        $region29: #{model_forward.1} parent=11 // pred_check
          %p402 = pneg %p181
        $region30: #{model_forward.1} parent=11 // pred_check_branch
          %404 = sbr.rel (%p402) target = $region32
        $region31: #{model_forward.1} parent=11 // pred_region
          %406 = vsyncadd [#allocation3], 0
          %s407 = sshll.u32 %s6, 4
          %s408 = int_to_ptr.hbm [resolvable:$true] %s407
          %s409 = sshll.u32 [#allocation2], 4
          %s410 = int_to_ptr.vmem [resolvable:$true] %s409
          %415 = dma.hbm_to_vmem [thread:$0]  %s408, 2048, %s410, [#allocation3], 128, 128, 8
        $region32: #{model_forward.1} parent=11 // pred_fallthru
          _
        // Predicated region
        $region33: #{model_forward.1} parent=11 // pred_check
          %p416 = pneg %p202
        $region34: #{model_forward.1} parent=11 // pred_check_branch
          %418 = sbr.rel (%p416) target = $region36
        $region35: #{model_forward.1} parent=11 // pred_region
          _
        $region36: #{model_forward.1} parent=11 // pred_fallthru
          _
        // Predicated region
        $region37: #{model_forward.1} parent=11 // pred_check
          %p419 = pneg %p223
        $region38: #{model_forward.1} parent=11 // pred_check_branch
          %421 = sbr.rel (%p419) target = $region40
        $region39: #{model_forward.1} parent=11 // pred_region
          %423 = vsyncadd [#allocation5], 0
          %s424 = sshll.u32 %s8, 4
          %s425 = int_to_ptr.hbm [resolvable:$true] %s424
          %s426 = sshll.u32 [#allocation4], 4
          %s427 = int_to_ptr.vmem [resolvable:$true] %s426
          %432 = dma.hbm_to_vmem [thread:$0]  %s425, 2048, %s427, [#allocation5], 128, 128, 8
        $region40: #{model_forward.1} parent=11 // pred_fallthru
          _
        // Predicated region
        $region41: #{model_forward.1} parent=11 // pred_check
          %p433 = pneg %p244
        $region42: #{model_forward.1} parent=11 // pred_check_branch
          %435 = sbr.rel (%p433) target = $region44
        $region43: #{model_forward.1} parent=11 // pred_region
          _
        $region44: #{model_forward.1} parent=11 // pred_fallthru
          _
        // Predicated region
        $region45: #{model_forward.1} parent=11 // pred_check
          %p436 = pneg %p265
        $region46: #{model_forward.1} parent=11 // pred_check_branch
          %438 = sbr.rel (%p436) target = $region48
        $region47: #{model_forward.1} parent=11 // pred_region
          _
        $region48: #{model_forward.1} parent=11 // pred_fallthru
          _
        // Predicated region
        $region49: #{model_forward.1} parent=11 // pred_check
          %p439 = pneg %p286
        $region50: #{model_forward.1} parent=11 // pred_check_branch
          %441 = sbr.rel (%p439) target = $region52
        $region51: #{model_forward.1} parent=11 // pred_region
          %443 = vsyncadd [#allocation5], 0
          %s444 = sshll.u32 %s11, 4
          %s445 = int_to_ptr.hbm [resolvable:$true] %s444
          %s446 = sshll.u32 [#allocation6], 4
          %s447 = int_to_ptr.vmem [resolvable:$true] %s446
          %452 = dma.hbm_to_vmem [thread:$0]  %s445, 12288, %s447, [#allocation5], 384, 384, 24
        $region52: #{model_forward.1} parent=11 // pred_fallthru
          _
        // Predicated region
        $region53: #{model_forward.1} parent=11 // pred_check
          %p453 = pneg %p307
        $region54: #{model_forward.1} parent=11 // pred_check_branch
          %455 = sbr.rel (%p453) target = $region56
        $region55: #{model_forward.1} parent=11 // pred_region
          _
        $region56: #{model_forward.1} parent=11 // pred_fallthru
          _
        // Predicated region
        $region57: #{model_forward.1} parent=11 // pred_check
          %p456 = pneg %p328
        $region58: #{model_forward.1} parent=11 // pred_check_branch
          %458 = sbr.rel (%p456) target = $region60
        $region59: #{model_forward.1} parent=11 // pred_region
          %460 = vsyncadd [#allocation8], 0
          %s461 = sshll.u32 %s13, 4
          %s462 = int_to_ptr.hbm [resolvable:$true] %s461
          %s463 = sshll.u32 [#allocation7], 4
          %s464 = int_to_ptr.vmem [resolvable:$true] %s463
          %469 = dma.hbm_to_vmem [thread:$0]  %s462, 18432, %s464, [#allocation8], 384, 384, 24
        $region60: #{model_forward.1} parent=11 // pred_fallthru
          _
        // Predicated region
        $region61: #{model_forward.1} parent=11 // pred_check
          %p470 = pneg %p349
        $region62: #{model_forward.1} parent=11 // pred_check_branch
          %472 = sbr.rel (%p470) target = $region64
        $region63: #{model_forward.1} parent=11 // pred_region
          _
        $region64: #{model_forward.1} parent=11 // pred_fallthru
          _
      $region12: #{model_forward.1} parent=5 // pred_fallthru
        _
      %p473 = scmp.lt.s32.totalorder %s24, 2
      // Predicated region
      $region65: #{model_forward.1} parent=5 // pred_check
        %p474 = pneg %p473
      $region66: #{model_forward.1} parent=5 // pred_check_branch
        %476 = sbr.rel (%p474) target = $region68
      $region67: #{model_forward.1} parent=5 // pred_region
        // Predicated region
        $region69: #{model_forward.1} parent=67 // pred_check
          %p477 = pneg %p44
        $region70: #{model_forward.1} parent=67 // pred_check_branch
          %479 = sbr.rel (%p477) target = $region72
        $region71: #{model_forward.1} parent=67 // pred_region
          %p480 = scmp.lt.s32.totalorder %s24, 1
          %s481 = scalar_select %p480, %s24, 1
          %s482 = smul.addr %s481, 4
          %s483 = smul.addr %s482, 8
          %s484 = scalar_lea.vmem %s0, %s483
        $region72: #{model_forward.1} parent=67 // pred_fallthru
          _
        // Predicated region
        $region73: #{model_forward.1} parent=67 // pred_check
          %p485 = pneg %p91
        $region74: #{model_forward.1} parent=67 // pred_check_branch
          %487 = sbr.rel (%p485) target = $region76
        $region75: #{model_forward.1} parent=67 // pred_region
          %p488 = scmp.lt.s32.totalorder %s24, 1
          %s489 = scalar_select %p488, %s24, 1
          %s490 = smul.addr %s489, 2
          %s491 = scalar_lea.vmem %s2, %s490
        $region76: #{model_forward.1} parent=67 // pred_fallthru
          _
      $region68: #{model_forward.1} parent=5 // pred_fallthru
        _
      %p492 = scmp.le.s32.totalorder 1, %s24
      %p493 = scmp.lt.s32.totalorder %s24, 3
      %p494 = pnand %p492, %p493
      %p495 = pneg %p494
      // Predicated region
      $region77: #{model_forward.1} parent=5 // pred_check
        _
      $region78: #{model_forward.1} parent=5 // pred_check_branch
        %497 = sbr.rel (%p494) target = $region80
      $region79: #{model_forward.1} parent=5 // pred_region
        %s498 = ssub.s32 %s24, 1
        // Predicated region
        $region81: #{model_forward.1} parent=79 // pred_check
          %p499 = pneg %p181
        $region82: #{model_forward.1} parent=79 // pred_check_branch
          %501 = sbr.rel (%p499) target = $region84
        $region83: #{model_forward.1} parent=79 // pred_region
          %503 = dma.done [#allocation3], 2048
        $region84: #{model_forward.1} parent=79 // pred_fallthru
          _
        // Predicated region
        $region85: #{model_forward.1} parent=79 // pred_check
          %p504 = pneg %p223
        $region86: #{model_forward.1} parent=79 // pred_check_branch
          %506 = sbr.rel (%p504) target = $region88
        $region87: #{model_forward.1} parent=79 // pred_region
          %508 = dma.done [#allocation5], 2048
        $region88: #{model_forward.1} parent=79 // pred_fallthru
          _
        // Predicated region
        $region89: #{model_forward.1} parent=79 // pred_check
          %p509 = pneg %p286
        $region90: #{model_forward.1} parent=79 // pred_check_branch
          %511 = sbr.rel (%p509) target = $region92
        $region91: #{model_forward.1} parent=79 // pred_region
          %513 = dma.done [#allocation5], 12288
        $region92: #{model_forward.1} parent=79 // pred_fallthru
          _
        // Predicated region
        $region93: #{model_forward.1} parent=79 // pred_check
          %p514 = pneg %p328
        $region94: #{model_forward.1} parent=79 // pred_check_branch
          %516 = sbr.rel (%p514) target = $region96
        $region95: #{model_forward.1} parent=79 // pred_region
          %518 = dma.done [#allocation8], 18432
        $region96: #{model_forward.1} parent=79 // pred_fallthru
          _
        %p519 = scmp.lt.s32.totalorder %s29, 1
        %s520 = scalar_select %p519, %s29, 1
        %s521 = smul.addr %s520, 4
        %s522 = smul.addr %s521, 8
        %s523 = scalar_lea.vmem %s0, %s522
        %p524 = pneg %p50
        %p525 = pneg %p47
        %p526 = pneg %p71
        %p527 = pneg %p68
        %p528 = scmp.lt.s32.totalorder %s29, 1
        %s529 = scalar_select %p528, %s29, 1
        %s530 = smul.addr %s529, 2
        %s531 = scalar_lea.vmem %s2, %s530
        %p532 = pneg %p97
        %p533 = pneg %p94
        %p534 = pneg %p118
        %p535 = pneg %p115
        %p536 = pneg %p139
        %p537 = pneg %p136
        %p538 = pneg %p160
        %p539 = pneg %p157
        %p540 = pneg %p181
        %p541 = pneg %p178
        %p542 = pneg %p202
        %p543 = pneg %p199
        %p544 = pneg %p223
        %p545 = pneg %p220
        %p546 = pneg %p244
        %p547 = pneg %p241
        %p548 = pneg %p265
        %p549 = pneg %p262
        %p550 = pneg %p286
        %p551 = pneg %p283
        %p552 = pneg %p307
        %p553 = pneg %p304
        %p554 = pneg %p328
        %p555 = pneg %p325
        %p556 = pneg %p349
        %p557 = pneg %p346
        %p558 = pneg %p375
        %p559 = pneg %p372
        %p560 = scmp.lt.s32.totalorder %s29, 1
        %s561 = scalar_select %p560, %s29, 1
        %s562 = smul.addr %s561, 12
        %s563 = smul.addr %s562, 8
        %s564 = scalar_lea.vmem %s15, %s563
        %p565 = scmp.lt.s32.totalorder %s29, 1
        %s566 = scalar_select %p565, %s29, 1
        %s567 = smul.addr %s566, 4
        %s568 = smul.addr %s567, 8
        %s569 = scalar_lea.vmem %s0, %s568
        %p570 = scmp.lt.s32.totalorder %s29, 1
        %s571 = scalar_select %p570, %s29, 1
        %s572 = smul.addr %s571, 2
        %s573 = scalar_lea.vmem %s2, %s572
        %p574 = scmp.lt.s32.totalorder %s29, 1
        %s575 = scalar_select %p574, %s29, 1
        %s576 = smul.addr %s575, 12
        %s577 = smul.addr %s576, 8
        %s578 = scalar_lea.vmem %s15, %s577
        %v579 = vld [vmem:[%s569] sm:$0xff]
        %v580 = vld [vmem:[%s569 + $0x8] sm:$0xff]
        %v581 = vld [vmem:[%s569 + $0x10] sm:$0xff]
        %v582 = vld [vmem:[%s569 + $0x18] sm:$0xff]
        %v583 = vld [vmem:[%s1] sm:$0xff]
        %v584 = vld [vmem:[%s1 + $0x8] sm:$0xff]
        %v585 = vld [vmem:[%s1 + $0x10] sm:$0xff]
        %v586 = vld [vmem:[%s1 + $0x18] sm:$0xff]
        %v587 = vadd.f32 %v579, %v583
        %v588 = vadd.f32 %v580, %v584
        %v589 = vadd.f32 %v581, %v585
        %v590 = vadd.f32 %v582, %v586
        %v591 = vld [vmem:[%s4] sm:$0xff]
        %v592 = vld [vmem:[%s4 + $0x8] sm:$0xff]
        %v593 = vld [vmem:[%s4 + $0x10] sm:$0xff]
        %v594 = vld [vmem:[%s4 + $0x18] sm:$0xff]
        %v595 = vld [vmem:[%s4 + $0x20] sm:$0xff]
        %v596 = vld [vmem:[%s4 + $0x28] sm:$0xff]
        %v597 = vld [vmem:[%s4 + $0x30] sm:$0xff]
        %v598 = vld [vmem:[%s4 + $0x38] sm:$0xff]
        %v599 = vld [vmem:[%s4 + $0x40] sm:$0xff]
        %v600 = vld [vmem:[%s4 + $0x48] sm:$0xff]
        %v601 = vld [vmem:[%s4 + $0x50] sm:$0xff]
        %v602 = vld [vmem:[%s4 + $0x58] sm:$0xff]
        %v603 = vld [vmem:[%s4 + $0x60] sm:$0xff]
        %v604 = vld [vmem:[%s4 + $0x68] sm:$0xff]
        %v605 = vld [vmem:[%s4 + $0x70] sm:$0xff]
        %v606 = vld [vmem:[%s4 + $0x78] sm:$0xff]
        %v607 = vld [vmem:[%s5] sm:$0x1]
        %v609 = vperm.slane %v607, 0
        %611 = vmatpush.msra.mxu0 %v606
        %612 = vmatpush.msra.mxu0 %v605
        %613 = vmatpush.msra.mxu0 %v604
        %614 = vmatpush.msra.mxu0 %v603
        %615 = vmatpush.msra.mxu0 %v602
        %616 = vmatpush.msra.mxu0 %v601
        %617 = vmatpush.msra.mxu0 %v600
        %618 = vmatpush.msra.mxu0 %v599
        %619 = vmatpush.msra.mxu0 %v598
        %620 = vmatpush.msra.mxu0 %v597
        %621 = vmatpush.msra.mxu0 %v596
        %622 = vmatpush.msra.mxu0 %v595
        %623 = vmatpush.msra.mxu0 %v594
        %624 = vmatpush.msra.mxu0 %v593
        %625 = vmatpush.msra.mxu0 %v592
        %626 = vmatpush.msra.mxu0 %v591
        %627 = vmatmul.f32.gmra.mxu0 %v587
        %v628 = vpop.f32.mrf.mxu0
        %v629 = vadd.f32 %v609, %v628
        %630 = vmatmul.f32.gmra.mxu0 %v588
        %v631 = vpop.f32.mrf.mxu0
        %v632 = vadd.f32 %v609, %v631
        %633 = vmatmul.f32.gmra.mxu0 %v589
        %v634 = vpop.f32.mrf.mxu0
        %v635 = vadd.f32 %v609, %v634
        %636 = vmatmul.f32.gmra.mxu0 %v590
        %v637 = vpop.f32.mrf.mxu0
        %v638 = vadd.f32 %v609, %v637
        %639 = vdwg.mxu0
        %v640 = vtanh.pop %v629
        %v641 = vtanh.pop %v632
        %v642 = vtanh.pop %v635
        %v643 = vtanh.pop %v638
        %v644 = vld [vmem:[%s573] sm:$0x3]
        %vm645 = vcmask 261120
        %v647 = vsel %vm645, %v644, 0
        %649 = vmatpush.msra.mxu0 0.0
        %650 = vmatpush.msra.mxu0 0.0
        %651 = vmatpush.msra.mxu0 0.0
        %652 = vmatpush.msra.mxu0 0.0
        %653 = vmatpush.msra.mxu0 0.0
        %654 = vmatpush.msra.mxu0 0.0
        %655 = vmatpush.msra.mxu0 0.0
        %656 = vmatpush.msra.mxu0 0.0
        %657 = vmatpush.msra.mxu0 0.0
        %658 = vmatpush.msra.mxu0 0.0
        %659 = vmatpush.msra.mxu0 0.0
        %660 = vmatpush.msra.mxu0 0.0
        %661 = vmatpush.msra.mxu0 %v590
        %662 = vmatpush.msra.mxu0 %v589
        %663 = vmatpush.msra.mxu0 %v588
        %664 = vmatpush.msra.mxu0 %v587
        %665 = vmatmul.f32.gmra.mxu0 %v647
        %v666 = vpop.f32.mrf.mxu0
        %v667 = vadd.f32 0.0, %v666
        %668 = vdwg.mxu0
        %v669 = vld [vmem:[#allocation2] sm:$0xff]
        %v670 = vld [vmem:[#allocation2 + $0x8] sm:$0xff]
        %v671 = vld [vmem:[#allocation2 + $0x10] sm:$0xff]
        %v672 = vld [vmem:[#allocation2 + $0x18] sm:$0xff]
        %v673 = vld [vmem:[#allocation2 + $0x20] sm:$0xff]
        %v674 = vld [vmem:[#allocation2 + $0x28] sm:$0xff]
        %v675 = vld [vmem:[#allocation2 + $0x30] sm:$0xff]
        %v676 = vld [vmem:[#allocation2 + $0x38] sm:$0xff]
        %v677 = vld [vmem:[#allocation2 + $0x40] sm:$0xff]
        %v678 = vld [vmem:[#allocation2 + $0x48] sm:$0xff]
        %v679 = vld [vmem:[#allocation2 + $0x50] sm:$0xff]
        %v680 = vld [vmem:[#allocation2 + $0x58] sm:$0xff]
        %v681 = vld [vmem:[#allocation2 + $0x60] sm:$0xff]
        %v682 = vld [vmem:[#allocation2 + $0x68] sm:$0xff]
        %v683 = vld [vmem:[#allocation2 + $0x70] sm:$0xff]
        %v684 = vld [vmem:[#allocation2 + $0x78] sm:$0xff]
        %v685 = vld [vmem:[%s7] sm:$0x1]
        %v687 = vperm.slane %v685, 0
        %689 = vmatpush.msra.mxu0 %v684
        %690 = vmatpush.msra.mxu0 %v683
        %691 = vmatpush.msra.mxu0 %v682
        %692 = vmatpush.msra.mxu0 %v681
        %693 = vmatpush.msra.mxu0 %v680
        %694 = vmatpush.msra.mxu0 %v679
        %695 = vmatpush.msra.mxu0 %v678
        %696 = vmatpush.msra.mxu0 %v677
        %697 = vmatpush.msra.mxu0 %v676
        %698 = vmatpush.msra.mxu0 %v675
        %699 = vmatpush.msra.mxu0 %v674
        %700 = vmatpush.msra.mxu0 %v673
        %701 = vmatpush.msra.mxu0 %v672
        %702 = vmatpush.msra.mxu0 %v671
        %703 = vmatpush.msra.mxu0 %v670
        %704 = vmatpush.msra.mxu0 %v669
        %705 = vmatmul.f32.gmra.mxu0 %v667
        %v706 = vpop.f32.mrf.mxu0
        %v707 = vadd.f32 %v687, %v706
        %708 = vdwg.mxu0
        %v709 = vtanh.pop %v707
        %vm710 = vcmask 1041408
        %v711 = vsel %vm710, %v709, 0.0
        %v712 = vrot.slane %v711, 4
        %v713 = vadd.f32 %v711, %v712
        %v714 = vrot.slane %v713, 2
        %v715 = vadd.f32 %v713, %v714
        %v716 = vrot.slane %v715, 1
        %v717 = vadd.f32 %v715, %v716
        %v718 = vrcp.pop 2.0
        %v719 = vmul.f32 2.0, %v718
        %v720 = vsub.f32 1.0, %v719
        %v721 = vmul.f32 %v718, %v720
        %v722 = vadd.f32 %v718, %v721
        %vm723 = vweird.f32 %v718
        %v724 = vsel %vm723, %v718, %v722
        %v725 = vmul.f32 %v717, %v724
        %v726 = vld [vmem:[#allocation4] sm:$0xff]
        %v727 = vld [vmem:[#allocation4 + $0x8] sm:$0xff]
        %v728 = vld [vmem:[#allocation4 + $0x10] sm:$0xff]
        %v729 = vld [vmem:[#allocation4 + $0x18] sm:$0xff]
        %v730 = vld [vmem:[#allocation4 + $0x20] sm:$0xff]
        %v731 = vld [vmem:[#allocation4 + $0x28] sm:$0xff]
        %v732 = vld [vmem:[#allocation4 + $0x30] sm:$0xff]
        %v733 = vld [vmem:[#allocation4 + $0x38] sm:$0xff]
        %v734 = vld [vmem:[#allocation4 + $0x40] sm:$0xff]
        %v735 = vld [vmem:[#allocation4 + $0x48] sm:$0xff]
        %v736 = vld [vmem:[#allocation4 + $0x50] sm:$0xff]
        %v737 = vld [vmem:[#allocation4 + $0x58] sm:$0xff]
        %v738 = vld [vmem:[#allocation4 + $0x60] sm:$0xff]
        %v739 = vld [vmem:[#allocation4 + $0x68] sm:$0xff]
        %v740 = vld [vmem:[#allocation4 + $0x70] sm:$0xff]
        %v741 = vld [vmem:[#allocation4 + $0x78] sm:$0xff]
        %v742 = vld [vmem:[%s9] sm:$0x1]
        %743 = vmatpush.msra.mxu0 %v741
        %744 = vmatpush.msra.mxu0 %v740
        %745 = vmatpush.msra.mxu0 %v739
        %746 = vmatpush.msra.mxu0 %v738
        %747 = vmatpush.msra.mxu0 %v737
        %748 = vmatpush.msra.mxu0 %v736
        %749 = vmatpush.msra.mxu0 %v735
        %750 = vmatpush.msra.mxu0 %v734
        %751 = vmatpush.msra.mxu0 %v733
        %752 = vmatpush.msra.mxu0 %v732
        %753 = vmatpush.msra.mxu0 %v731
        %754 = vmatpush.msra.mxu0 %v730
        %755 = vmatpush.msra.mxu0 %v729
        %756 = vmatpush.msra.mxu0 %v728
        %757 = vmatpush.msra.mxu0 %v727
        %758 = vmatpush.msra.mxu0 %v726
        %759 = vmatmul.f32.gmra.mxu0 %v725
        %v760 = vpop.f32.mrf.mxu0
        %v761 = vadd.f32 %v742, %v760
        %762 = vdwg.mxu0
        %v763 = vtanh.pop %v761
        %v764 = vperm.slane %v763, 0
        %v765 = vld [vmem:[#allocation6] sm:$0xff]
        %v766 = vld [vmem:[#allocation6 + $0x8] sm:$0xff]
        %v767 = vld [vmem:[#allocation6 + $0x10] sm:$0xff]
        %v768 = vld [vmem:[#allocation6 + $0x18] sm:$0xff]
        %v769 = vld [vmem:[#allocation6 + $0x20] sm:$0xff]
        %v770 = vld [vmem:[#allocation6 + $0x28] sm:$0xff]
        %v771 = vld [vmem:[#allocation6 + $0x30] sm:$0xff]
        %v772 = vld [vmem:[#allocation6 + $0x38] sm:$0xff]
        %v773 = vld [vmem:[#allocation6 + $0x40] sm:$0xff]
        %v774 = vld [vmem:[#allocation6 + $0x48] sm:$0xff]
        %v775 = vld [vmem:[#allocation6 + $0x50] sm:$0xff]
        %v776 = vld [vmem:[#allocation6 + $0x58] sm:$0xff]
        %v777 = vld [vmem:[#allocation6 + $0x60] sm:$0xff]
        %v778 = vld [vmem:[#allocation6 + $0x68] sm:$0xff]
        %v779 = vld [vmem:[#allocation6 + $0x70] sm:$0xff]
        %v780 = vld [vmem:[#allocation6 + $0x78] sm:$0xff]
        %v781 = vld [vmem:[#allocation6 + $0x80] sm:$0xff]
        %v782 = vld [vmem:[#allocation6 + $0x88] sm:$0xff]
        %v783 = vld [vmem:[#allocation6 + $0x90] sm:$0xff]
        %v784 = vld [vmem:[#allocation6 + $0x98] sm:$0xff]
        %v785 = vld [vmem:[#allocation6 + $0xa0] sm:$0xff]
        %v786 = vld [vmem:[#allocation6 + $0xa8] sm:$0xff]
        %v787 = vld [vmem:[#allocation6 + $0xb0] sm:$0xff]
        %v788 = vld [vmem:[#allocation6 + $0xb8] sm:$0xff]
        %v789 = vld [vmem:[#allocation6 + $0xc0] sm:$0xff]
        %v790 = vld [vmem:[#allocation6 + $0xc8] sm:$0xff]
        %v791 = vld [vmem:[#allocation6 + $0xd0] sm:$0xff]
        %v792 = vld [vmem:[#allocation6 + $0xd8] sm:$0xff]
        %v793 = vld [vmem:[#allocation6 + $0xe0] sm:$0xff]
        %v794 = vld [vmem:[#allocation6 + $0xe8] sm:$0xff]
        %v795 = vld [vmem:[#allocation6 + $0xf0] sm:$0xff]
        %v796 = vld [vmem:[#allocation6 + $0xf8] sm:$0xff]
        %v797 = vld [vmem:[#allocation6 + $0x100] sm:$0xff]
        %v798 = vld [vmem:[#allocation6 + $0x108] sm:$0xff]
        %v799 = vld [vmem:[#allocation6 + $0x110] sm:$0xff]
        %v800 = vld [vmem:[#allocation6 + $0x118] sm:$0xff]
        %v801 = vld [vmem:[#allocation6 + $0x120] sm:$0xff]
        %v802 = vld [vmem:[#allocation6 + $0x128] sm:$0xff]
        %v803 = vld [vmem:[#allocation6 + $0x130] sm:$0xff]
        %v804 = vld [vmem:[#allocation6 + $0x138] sm:$0xff]
        %v805 = vld [vmem:[#allocation6 + $0x140] sm:$0xff]
        %v806 = vld [vmem:[#allocation6 + $0x148] sm:$0xff]
        %v807 = vld [vmem:[#allocation6 + $0x150] sm:$0xff]
        %v808 = vld [vmem:[#allocation6 + $0x158] sm:$0xff]
        %v809 = vld [vmem:[#allocation6 + $0x160] sm:$0xff]
        %v810 = vld [vmem:[#allocation6 + $0x168] sm:$0xff]
        %v811 = vld [vmem:[#allocation6 + $0x170] sm:$0xff]
        %v812 = vld [vmem:[#allocation6 + $0x178] sm:$0xff]
        %v813 = vld [vmem:[#allocation6 + $0x180] sm:$0xff]
        %v814 = vld [vmem:[#allocation6 + $0x188] sm:$0xff]
        %v815 = vld [vmem:[#allocation6 + $0x190] sm:$0xff]
        %v816 = vld [vmem:[#allocation6 + $0x198] sm:$0xff]
        %v817 = vld [vmem:[#allocation6 + $0x1a0] sm:$0xff]
        %v818 = vld [vmem:[#allocation6 + $0x1a8] sm:$0xff]
        %v819 = vld [vmem:[#allocation6 + $0x1b0] sm:$0xff]
        %v820 = vld [vmem:[#allocation6 + $0x1b8] sm:$0xff]
        %v821 = vld [vmem:[#allocation6 + $0x1c0] sm:$0xff]
        %v822 = vld [vmem:[#allocation6 + $0x1c8] sm:$0xff]
        %v823 = vld [vmem:[#allocation6 + $0x1d0] sm:$0xff]
        %v824 = vld [vmem:[#allocation6 + $0x1d8] sm:$0xff]
        %v825 = vld [vmem:[#allocation6 + $0x1e0] sm:$0xff]
        %v826 = vld [vmem:[#allocation6 + $0x1e8] sm:$0xff]
        %v827 = vld [vmem:[#allocation6 + $0x1f0] sm:$0xff]
        %v828 = vld [vmem:[#allocation6 + $0x1f8] sm:$0xff]
        %v829 = vld [vmem:[#allocation6 + $0x200] sm:$0xff]
        %v830 = vld [vmem:[#allocation6 + $0x208] sm:$0xff]
        %v831 = vld [vmem:[#allocation6 + $0x210] sm:$0xff]
        %v832 = vld [vmem:[#allocation6 + $0x218] sm:$0xff]
        %v833 = vld [vmem:[#allocation6 + $0x220] sm:$0xff]
        %v834 = vld [vmem:[#allocation6 + $0x228] sm:$0xff]
        %v835 = vld [vmem:[#allocation6 + $0x230] sm:$0xff]
        %v836 = vld [vmem:[#allocation6 + $0x238] sm:$0xff]
        %v837 = vld [vmem:[#allocation6 + $0x240] sm:$0xff]
        %v838 = vld [vmem:[#allocation6 + $0x248] sm:$0xff]
        %v839 = vld [vmem:[#allocation6 + $0x250] sm:$0xff]
        %v840 = vld [vmem:[#allocation6 + $0x258] sm:$0xff]
        %v841 = vld [vmem:[#allocation6 + $0x260] sm:$0xff]
        %v842 = vld [vmem:[#allocation6 + $0x268] sm:$0xff]
        %v843 = vld [vmem:[#allocation6 + $0x270] sm:$0xff]
        %v844 = vld [vmem:[#allocation6 + $0x278] sm:$0xff]
        %v845 = vld [vmem:[#allocation6 + $0x280] sm:$0xff]
        %v846 = vld [vmem:[#allocation6 + $0x288] sm:$0xff]
        %v847 = vld [vmem:[#allocation6 + $0x290] sm:$0xff]
        %v848 = vld [vmem:[#allocation6 + $0x298] sm:$0xff]
        %v849 = vld [vmem:[#allocation6 + $0x2a0] sm:$0xff]
        %v850 = vld [vmem:[#allocation6 + $0x2a8] sm:$0xff]
        %v851 = vld [vmem:[#allocation6 + $0x2b0] sm:$0xff]
        %v852 = vld [vmem:[#allocation6 + $0x2b8] sm:$0xff]
        %v853 = vld [vmem:[#allocation6 + $0x2c0] sm:$0xff]
        %v854 = vld [vmem:[#allocation6 + $0x2c8] sm:$0xff]
        %v855 = vld [vmem:[#allocation6 + $0x2d0] sm:$0xff]
        %v856 = vld [vmem:[#allocation6 + $0x2d8] sm:$0xff]
        %v857 = vld [vmem:[#allocation6 + $0x2e0] sm:$0xff]
        %v858 = vld [vmem:[#allocation6 + $0x2e8] sm:$0xff]
        %v859 = vld [vmem:[#allocation6 + $0x2f0] sm:$0xff]
        %v860 = vld [vmem:[#allocation6 + $0x2f8] sm:$0xff]
        %v861 = vld [vmem:[%s12] sm:$0x7]
        %v863 = vperm.slane %v861, 0
        %v864 = vperm.slane %v861, 1
        %v865 = vperm.slane %v861, 2
        %869 = vmatpush.msra.mxu0 %v810
        %870 = vmatpush.msra.mxu0 %v807
        %871 = vmatpush.msra.mxu0 %v804
        %872 = vmatpush.msra.mxu0 %v801
        %873 = vmatpush.msra.mxu0 %v798
        %874 = vmatpush.msra.mxu0 %v795
        %875 = vmatpush.msra.mxu0 %v792
        %876 = vmatpush.msra.mxu0 %v789
        %877 = vmatpush.msra.mxu0 %v786
        %878 = vmatpush.msra.mxu0 %v783
        %879 = vmatpush.msra.mxu0 %v780
        %880 = vmatpush.msra.mxu0 %v777
        %881 = vmatpush.msra.mxu0 %v774
        %882 = vmatpush.msra.mxu0 %v771
        %883 = vmatpush.msra.mxu0 %v768
        %884 = vmatpush.msra.mxu0 %v765
        %885 = vmatmul.f32.gmra.mxu0 %v709
        %v886 = vpop.f32.mrf.mxu0
        %v887 = vadd.f32 %v863, %v886
        %888 = vdwg.mxu0
        %889 = vmatpush.msra.mxu0 %v858
        %890 = vmatpush.msra.mxu0 %v855
        %891 = vmatpush.msra.mxu0 %v852
        %892 = vmatpush.msra.mxu0 %v849
        %893 = vmatpush.msra.mxu0 %v846
        %894 = vmatpush.msra.mxu0 %v843
        %895 = vmatpush.msra.mxu0 %v840
        %896 = vmatpush.msra.mxu0 %v837
        %897 = vmatpush.msra.mxu0 %v834
        %898 = vmatpush.msra.mxu0 %v831
        %899 = vmatpush.msra.mxu0 %v828
        %900 = vmatpush.msra.mxu0 %v825
        %901 = vmatpush.msra.mxu0 %v822
        %902 = vmatpush.msra.mxu0 %v819
        %903 = vmatpush.msra.mxu0 %v816
        %904 = vmatpush.msra.mxu0 %v813
        %905 = vmatmul.f32.gmra.mxu0 %v764
        %v906 = vpop.f32.mrf.mxu0
        %v907 = vadd.f32 %v887, %v906
        %908 = vdwg.mxu0
        %909 = vmatpush.msra.mxu0 %v811
        %910 = vmatpush.msra.mxu0 %v808
        %911 = vmatpush.msra.mxu0 %v805
        %912 = vmatpush.msra.mxu0 %v802
        %913 = vmatpush.msra.mxu0 %v799
        %914 = vmatpush.msra.mxu0 %v796
        %915 = vmatpush.msra.mxu0 %v793
        %916 = vmatpush.msra.mxu0 %v790
        %917 = vmatpush.msra.mxu0 %v787
        %918 = vmatpush.msra.mxu0 %v784
        %919 = vmatpush.msra.mxu0 %v781
        %920 = vmatpush.msra.mxu0 %v778
        %921 = vmatpush.msra.mxu0 %v775
        %922 = vmatpush.msra.mxu0 %v772
        %923 = vmatpush.msra.mxu0 %v769
        %924 = vmatpush.msra.mxu0 %v766
        %925 = vmatmul.f32.gmra.mxu0 %v709
        %v926 = vpop.f32.mrf.mxu0
        %v927 = vadd.f32 %v864, %v926
        %928 = vdwg.mxu0
        %929 = vmatpush.msra.mxu0 %v859
        %930 = vmatpush.msra.mxu0 %v856
        %931 = vmatpush.msra.mxu0 %v853
        %932 = vmatpush.msra.mxu0 %v850
        %933 = vmatpush.msra.mxu0 %v847
        %934 = vmatpush.msra.mxu0 %v844
        %935 = vmatpush.msra.mxu0 %v841
        %936 = vmatpush.msra.mxu0 %v838
        %937 = vmatpush.msra.mxu0 %v835
        %938 = vmatpush.msra.mxu0 %v832
        %939 = vmatpush.msra.mxu0 %v829
        %940 = vmatpush.msra.mxu0 %v826
        %941 = vmatpush.msra.mxu0 %v823
        %942 = vmatpush.msra.mxu0 %v820
        %943 = vmatpush.msra.mxu0 %v817
        %944 = vmatpush.msra.mxu0 %v814
        %945 = vmatmul.f32.gmra.mxu0 %v764
        %v946 = vpop.f32.mrf.mxu0
        %v947 = vadd.f32 %v927, %v946
        %948 = vdwg.mxu0
        %949 = vmatpush.msra.mxu0 %v812
        %950 = vmatpush.msra.mxu0 %v809
        %951 = vmatpush.msra.mxu0 %v806
        %952 = vmatpush.msra.mxu0 %v803
        %953 = vmatpush.msra.mxu0 %v800
        %954 = vmatpush.msra.mxu0 %v797
        %955 = vmatpush.msra.mxu0 %v794
        %956 = vmatpush.msra.mxu0 %v791
        %957 = vmatpush.msra.mxu0 %v788
        %958 = vmatpush.msra.mxu0 %v785
        %959 = vmatpush.msra.mxu0 %v782
        %960 = vmatpush.msra.mxu0 %v779
        %961 = vmatpush.msra.mxu0 %v776
        %962 = vmatpush.msra.mxu0 %v773
        %963 = vmatpush.msra.mxu0 %v770
        %964 = vmatpush.msra.mxu0 %v767
        %965 = vmatmul.f32.gmra.mxu0 %v709
        %v966 = vpop.f32.mrf.mxu0
        %v967 = vadd.f32 %v865, %v966
        %968 = vdwg.mxu0
        %969 = vmatpush.msra.mxu0 %v860
        %970 = vmatpush.msra.mxu0 %v857
        %971 = vmatpush.msra.mxu0 %v854
        %972 = vmatpush.msra.mxu0 %v851
        %973 = vmatpush.msra.mxu0 %v848
        %974 = vmatpush.msra.mxu0 %v845
        %975 = vmatpush.msra.mxu0 %v842
        %976 = vmatpush.msra.mxu0 %v839
        %977 = vmatpush.msra.mxu0 %v836
        %978 = vmatpush.msra.mxu0 %v833
        %979 = vmatpush.msra.mxu0 %v830
        %980 = vmatpush.msra.mxu0 %v827
        %981 = vmatpush.msra.mxu0 %v824
        %982 = vmatpush.msra.mxu0 %v821
        %983 = vmatpush.msra.mxu0 %v818
        %984 = vmatpush.msra.mxu0 %v815
        %985 = vmatmul.f32.gmra.mxu0 %v764
        %v986 = vpop.f32.mrf.mxu0
        %v987 = vadd.f32 %v967, %v986
        %988 = vdwg.mxu0
        %v989 = vld [vmem:[%s10] sm:$0xff]
        %v990 = vld [vmem:[%s10 + $0x8] sm:$0xff]
        %v991 = vld [vmem:[%s10 + $0x10] sm:$0xff]
        %v992 = vld [vmem:[%s10 + $0x18] sm:$0xff]
        %v993 = vld [vmem:[%s10 + $0x20] sm:$0xff]
        %v994 = vld [vmem:[%s10 + $0x28] sm:$0xff]
        %v995 = vld [vmem:[%s10 + $0x30] sm:$0xff]
        %v996 = vld [vmem:[%s10 + $0x38] sm:$0xff]
        %v997 = vld [vmem:[%s10 + $0x40] sm:$0xff]
        %v998 = vld [vmem:[%s10 + $0x48] sm:$0xff]
        %v999 = vld [vmem:[%s10 + $0x50] sm:$0xff]
        %v1000 = vld [vmem:[%s10 + $0x58] sm:$0xff]
        %v1001 = vld [vmem:[%s10 + $0x60] sm:$0xff]
        %v1002 = vld [vmem:[%s10 + $0x68] sm:$0xff]
        %v1003 = vld [vmem:[%s10 + $0x70] sm:$0xff]
        %v1004 = vld [vmem:[%s10 + $0x78] sm:$0xff]
        %v1005 = vld [vmem:[%s10 + $0x80] sm:$0xff]
        %v1006 = vld [vmem:[%s10 + $0x88] sm:$0xff]
        %v1007 = vld [vmem:[%s10 + $0x90] sm:$0xff]
        %v1008 = vld [vmem:[%s10 + $0x98] sm:$0xff]
        %v1009 = vld [vmem:[%s10 + $0xa0] sm:$0xff]
        %v1010 = vld [vmem:[%s10 + $0xa8] sm:$0xff]
        %v1011 = vld [vmem:[%s10 + $0xb0] sm:$0xff]
        %v1012 = vld [vmem:[%s10 + $0xb8] sm:$0xff]
        %v1013 = vld [vmem:[%s10 + $0xc0] sm:$0xff]
        %v1014 = vld [vmem:[%s10 + $0xc8] sm:$0xff]
        %v1015 = vld [vmem:[%s10 + $0xd0] sm:$0xff]
        %v1016 = vld [vmem:[%s10 + $0xd8] sm:$0xff]
        %v1017 = vld [vmem:[%s10 + $0xe0] sm:$0xff]
        %v1018 = vld [vmem:[%s10 + $0xe8] sm:$0xff]
        %v1019 = vld [vmem:[%s10 + $0xf0] sm:$0xff]
        %v1020 = vld [vmem:[%s10 + $0xf8] sm:$0xff]
        %v1021 = vld [vmem:[%s10 + $0x100] sm:$0xff]
        %v1022 = vld [vmem:[%s10 + $0x108] sm:$0xff]
        %v1023 = vld [vmem:[%s10 + $0x110] sm:$0xff]
        %v1024 = vld [vmem:[%s10 + $0x118] sm:$0xff]
        %v1025 = vld [vmem:[%s10 + $0x120] sm:$0xff]
        %v1026 = vld [vmem:[%s10 + $0x128] sm:$0xff]
        %v1027 = vld [vmem:[%s10 + $0x130] sm:$0xff]
        %v1028 = vld [vmem:[%s10 + $0x138] sm:$0xff]
        %v1029 = vld [vmem:[%s10 + $0x140] sm:$0xff]
        %v1030 = vld [vmem:[%s10 + $0x148] sm:$0xff]
        %v1031 = vld [vmem:[%s10 + $0x150] sm:$0xff]
        %v1032 = vld [vmem:[%s10 + $0x158] sm:$0xff]
        %v1033 = vld [vmem:[%s10 + $0x160] sm:$0xff]
        %v1034 = vld [vmem:[%s10 + $0x168] sm:$0xff]
        %v1035 = vld [vmem:[%s10 + $0x170] sm:$0xff]
        %v1036 = vld [vmem:[%s10 + $0x178] sm:$0xff]
        %v1037 = vld [vmem:[%s3] sm:$0xff]
        %v1038 = vld [vmem:[%s3 + $0x8] sm:$0xff]
        %v1039 = vld [vmem:[%s3 + $0x10] sm:$0xff]
        %v1040 = vld [vmem:[%s3 + $0x18] sm:$0xff]
        %vm1041 = vcmask 15360
        %v1043 = vsel %vm1041, %v1037, 0
        %v1046 = vsel %vm1041, %v1038, 0
        %v1049 = vsel %vm1041, %v1039, 0
        %v1052 = vsel %vm1041, %v1040, 0
        %v1055 = vsel %vm710, %v907, 0
        %v1058 = vsel %vm710, %v947, 0
        %v1061 = vsel %vm710, %v987, 0
        %1063 = vmatpush.msra.mxu0 0.0
        %1064 = vmatpush.msra.mxu0 0.0
        %1065 = vmatpush.msra.mxu0 0.0
        %1066 = vmatpush.msra.mxu0 0.0
        %1067 = vmatpush.msra.mxu0 0.0
        %1068 = vmatpush.msra.mxu0 0.0
        %1069 = vmatpush.msra.mxu0 0.0
        %1070 = vmatpush.msra.mxu0 0.0
        %1071 = vmatpush.msra.mxu0 0.0
        %1072 = vmatpush.msra.mxu0 0.0
        %1073 = vmatpush.msra.mxu0 0.0
        %1074 = vmatpush.msra.mxu0 0.0
        %1075 = vmatpush.msra.mxu0 0.0
        %1076 = vmatpush.msra.mxu0 0.0
        %1077 = vmatpush.msra.mxu0 0.0
        %1078 = vmatpush.msra.mxu0 %v1055
        %1079 = vmatmul.f32.gmra.mxu0 %v1043
        %v1080 = vpop.f32.mrf.mxu0
        %v1081 = vadd.f32 0.0, %v1080
        %1082 = vmatmul.f32.gmra.mxu0 %v1046
        %v1083 = vpop.f32.mrf.mxu0
        %v1084 = vadd.f32 0.0, %v1083
        %1085 = vmatmul.f32.gmra.mxu0 %v1049
        %v1086 = vpop.f32.mrf.mxu0
        %v1087 = vadd.f32 0.0, %v1086
        %1088 = vmatmul.f32.gmra.mxu0 %v1052
        %v1089 = vpop.f32.mrf.mxu0
        %v1090 = vadd.f32 0.0, %v1089
        %1091 = vdwg.mxu0
        %1092 = vmatpush.msra.mxu0 0.0
        %1093 = vmatpush.msra.mxu0 0.0
        %1094 = vmatpush.msra.mxu0 0.0
        %1095 = vmatpush.msra.mxu0 0.0
        %1096 = vmatpush.msra.mxu0 0.0
        %1097 = vmatpush.msra.mxu0 0.0
        %1098 = vmatpush.msra.mxu0 0.0
        %1099 = vmatpush.msra.mxu0 0.0
        %1100 = vmatpush.msra.mxu0 0.0
        %1101 = vmatpush.msra.mxu0 0.0
        %1102 = vmatpush.msra.mxu0 0.0
        %1103 = vmatpush.msra.mxu0 0.0
        %1104 = vmatpush.msra.mxu0 0.0
        %1105 = vmatpush.msra.mxu0 0.0
        %1106 = vmatpush.msra.mxu0 0.0
        %1107 = vmatpush.msra.mxu0 %v1058
        %1108 = vmatmul.f32.gmra.mxu0 %v1043
        %v1109 = vpop.f32.mrf.mxu0
        %v1110 = vadd.f32 0.0, %v1109
        %1111 = vmatmul.f32.gmra.mxu0 %v1046
        %v1112 = vpop.f32.mrf.mxu0
        %v1113 = vadd.f32 0.0, %v1112
        %1114 = vmatmul.f32.gmra.mxu0 %v1049
        %v1115 = vpop.f32.mrf.mxu0
        %v1116 = vadd.f32 0.0, %v1115
        %1117 = vmatmul.f32.gmra.mxu0 %v1052
        %v1118 = vpop.f32.mrf.mxu0
        %v1119 = vadd.f32 0.0, %v1118
        %1120 = vdwg.mxu0
        %1121 = vmatpush.msra.mxu0 0.0
        %1122 = vmatpush.msra.mxu0 0.0
        %1123 = vmatpush.msra.mxu0 0.0
        %1124 = vmatpush.msra.mxu0 0.0
        %1125 = vmatpush.msra.mxu0 0.0
        %1126 = vmatpush.msra.mxu0 0.0
        %1127 = vmatpush.msra.mxu0 0.0
        %1128 = vmatpush.msra.mxu0 0.0
        %1129 = vmatpush.msra.mxu0 0.0
        %1130 = vmatpush.msra.mxu0 0.0
        %1131 = vmatpush.msra.mxu0 0.0
        %1132 = vmatpush.msra.mxu0 0.0
        %1133 = vmatpush.msra.mxu0 0.0
        %1134 = vmatpush.msra.mxu0 0.0
        %1135 = vmatpush.msra.mxu0 0.0
        %1136 = vmatpush.msra.mxu0 %v1061
        %1137 = vmatmul.f32.gmra.mxu0 %v1043
        %v1138 = vpop.f32.mrf.mxu0
        %v1139 = vadd.f32 0.0, %v1138
        %1140 = vmatmul.f32.gmra.mxu0 %v1046
        %v1141 = vpop.f32.mrf.mxu0
        %v1142 = vadd.f32 0.0, %v1141
        %1143 = vmatmul.f32.gmra.mxu0 %v1049
        %v1144 = vpop.f32.mrf.mxu0
        %v1145 = vadd.f32 0.0, %v1144
        %1146 = vmatmul.f32.gmra.mxu0 %v1052
        %v1147 = vpop.f32.mrf.mxu0
        %v1148 = vadd.f32 0.0, %v1147
        %1149 = vdwg.mxu0
        %1150 = vmatpush.msra.mxu0 %v1034
        %1151 = vmatpush.msra.mxu0 %v1031
        %1152 = vmatpush.msra.mxu0 %v1028
        %1153 = vmatpush.msra.mxu0 %v1025
        %1154 = vmatpush.msra.mxu0 %v1022
        %1155 = vmatpush.msra.mxu0 %v1019
        %1156 = vmatpush.msra.mxu0 %v1016
        %1157 = vmatpush.msra.mxu0 %v1013
        %1158 = vmatpush.msra.mxu0 %v1010
        %1159 = vmatpush.msra.mxu0 %v1007
        %1160 = vmatpush.msra.mxu0 %v1004
        %1161 = vmatpush.msra.mxu0 %v1001
        %1162 = vmatpush.msra.mxu0 %v998
        %1163 = vmatpush.msra.mxu0 %v995
        %1164 = vmatpush.msra.mxu0 %v992
        %1165 = vmatpush.msra.mxu0 %v989
        %1166 = vmatmul.f32.gmra.mxu0 %v640
        %v1167 = vpop.f32.mrf.mxu0
        %v1168 = vadd.f32 %v1081, %v1167
        %1169 = vmatmul.f32.gmra.mxu0 %v641
        %v1170 = vpop.f32.mrf.mxu0
        %v1171 = vadd.f32 %v1084, %v1170
        %1172 = vmatmul.f32.gmra.mxu0 %v642
        %v1173 = vpop.f32.mrf.mxu0
        %v1174 = vadd.f32 %v1087, %v1173
        %1175 = vmatmul.f32.gmra.mxu0 %v643
        %v1176 = vpop.f32.mrf.mxu0
        %v1177 = vadd.f32 %v1090, %v1176
        %1178 = vdwg.mxu0
        %1179 = vmatpush.msra.mxu0 %v1035
        %1180 = vmatpush.msra.mxu0 %v1032
        %1181 = vmatpush.msra.mxu0 %v1029
        %1182 = vmatpush.msra.mxu0 %v1026
        %1183 = vmatpush.msra.mxu0 %v1023
        %1184 = vmatpush.msra.mxu0 %v1020
        %1185 = vmatpush.msra.mxu0 %v1017
        %1186 = vmatpush.msra.mxu0 %v1014
        %1187 = vmatpush.msra.mxu0 %v1011
        %1188 = vmatpush.msra.mxu0 %v1008
        %1189 = vmatpush.msra.mxu0 %v1005
        %1190 = vmatpush.msra.mxu0 %v1002
        %1191 = vmatpush.msra.mxu0 %v999
        %1192 = vmatpush.msra.mxu0 %v996
        %1193 = vmatpush.msra.mxu0 %v993
        %1194 = vmatpush.msra.mxu0 %v990
        %1195 = vmatmul.f32.gmra.mxu0 %v640
        %v1196 = vpop.f32.mrf.mxu0
        %v1197 = vadd.f32 %v1110, %v1196
        %1198 = vmatmul.f32.gmra.mxu0 %v641
        %v1199 = vpop.f32.mrf.mxu0
        %v1200 = vadd.f32 %v1113, %v1199
        %1201 = vmatmul.f32.gmra.mxu0 %v642
        %v1202 = vpop.f32.mrf.mxu0
        %v1203 = vadd.f32 %v1116, %v1202
        %1204 = vmatmul.f32.gmra.mxu0 %v643
        %v1205 = vpop.f32.mrf.mxu0
        %v1206 = vadd.f32 %v1119, %v1205
        %1207 = vdwg.mxu0
        %1208 = vmatpush.msra.mxu0 %v1036
        %1209 = vmatpush.msra.mxu0 %v1033
        %1210 = vmatpush.msra.mxu0 %v1030
        %1211 = vmatpush.msra.mxu0 %v1027
        %1212 = vmatpush.msra.mxu0 %v1024
        %1213 = vmatpush.msra.mxu0 %v1021
        %1214 = vmatpush.msra.mxu0 %v1018
        %1215 = vmatpush.msra.mxu0 %v1015
        %1216 = vmatpush.msra.mxu0 %v1012
        %1217 = vmatpush.msra.mxu0 %v1009
        %1218 = vmatpush.msra.mxu0 %v1006
        %1219 = vmatpush.msra.mxu0 %v1003
        %1220 = vmatpush.msra.mxu0 %v1000
        %1221 = vmatpush.msra.mxu0 %v997
        %1222 = vmatpush.msra.mxu0 %v994
        %1223 = vmatpush.msra.mxu0 %v991
        %1224 = vmatmul.f32.gmra.mxu0 %v640
        %v1225 = vpop.f32.mrf.mxu0
        %v1226 = vadd.f32 %v1139, %v1225
        %1227 = vmatmul.f32.gmra.mxu0 %v641
        %v1228 = vpop.f32.mrf.mxu0
        %v1229 = vadd.f32 %v1142, %v1228
        %1230 = vmatmul.f32.gmra.mxu0 %v642
        %v1231 = vpop.f32.mrf.mxu0
        %v1232 = vadd.f32 %v1145, %v1231
        %1233 = vmatmul.f32.gmra.mxu0 %v643
        %v1234 = vpop.f32.mrf.mxu0
        %v1235 = vadd.f32 %v1148, %v1234
        %1236 = vdwg.mxu0
        %v1237 = vmax.f32 %v1168, 0.0
        %v1238 = vmax.f32 %v1197, 0.0
        %v1239 = vmax.f32 %v1226, 0.0
        %v1240 = vmax.f32 %v1171, 0.0
        %v1241 = vmax.f32 %v1200, 0.0
        %v1242 = vmax.f32 %v1229, 0.0
        %v1243 = vmax.f32 %v1174, 0.0
        %v1244 = vmax.f32 %v1203, 0.0
        %v1245 = vmax.f32 %v1232, 0.0
        %v1246 = vmax.f32 %v1177, 0.0
        %v1247 = vmax.f32 %v1206, 0.0
        %v1248 = vmax.f32 %v1235, 0.0
        %v1249 = vld [vmem:[#allocation7] sm:$0xff]
        %v1250 = vld [vmem:[#allocation7 + $0x8] sm:$0xff]
        %v1251 = vld [vmem:[#allocation7 + $0x10] sm:$0xff]
        %v1252 = vld [vmem:[#allocation7 + $0x18] sm:$0xff]
        %v1253 = vld [vmem:[#allocation7 + $0x20] sm:$0xff]
        %v1254 = vld [vmem:[#allocation7 + $0x28] sm:$0xff]
        %v1255 = vld [vmem:[#allocation7 + $0x30] sm:$0xff]
        %v1256 = vld [vmem:[#allocation7 + $0x38] sm:$0xff]
        %v1257 = vld [vmem:[#allocation7 + $0x40] sm:$0xff]
        %v1258 = vld [vmem:[#allocation7 + $0x48] sm:$0xff]
        %v1259 = vld [vmem:[#allocation7 + $0x50] sm:$0xff]
        %v1260 = vld [vmem:[#allocation7 + $0x58] sm:$0xff]
        %v1261 = vld [vmem:[#allocation7 + $0x60] sm:$0xff]
        %v1262 = vld [vmem:[#allocation7 + $0x68] sm:$0xff]
        %v1263 = vld [vmem:[#allocation7 + $0x70] sm:$0xff]
        %v1264 = vld [vmem:[#allocation7 + $0x78] sm:$0xff]
        %v1265 = vld [vmem:[#allocation7 + $0x80] sm:$0xff]
        %v1266 = vld [vmem:[#allocation7 + $0x88] sm:$0xff]
        %v1267 = vld [vmem:[#allocation7 + $0x90] sm:$0xff]
        %v1268 = vld [vmem:[#allocation7 + $0x98] sm:$0xff]
        %v1269 = vld [vmem:[#allocation7 + $0xa0] sm:$0xff]
        %v1270 = vld [vmem:[#allocation7 + $0xa8] sm:$0xff]
        %v1271 = vld [vmem:[#allocation7 + $0xb0] sm:$0xff]
        %v1272 = vld [vmem:[#allocation7 + $0xb8] sm:$0xff]
        %v1273 = vld [vmem:[#allocation7 + $0xc0] sm:$0xff]
        %v1274 = vld [vmem:[#allocation7 + $0xc8] sm:$0xff]
        %v1275 = vld [vmem:[#allocation7 + $0xd0] sm:$0xff]
        %v1276 = vld [vmem:[#allocation7 + $0xd8] sm:$0xff]
        %v1277 = vld [vmem:[#allocation7 + $0xe0] sm:$0xff]
        %v1278 = vld [vmem:[#allocation7 + $0xe8] sm:$0xff]
        %v1279 = vld [vmem:[#allocation7 + $0xf0] sm:$0xff]
        %v1280 = vld [vmem:[#allocation7 + $0xf8] sm:$0xff]
        %v1281 = vld [vmem:[#allocation7 + $0x100] sm:$0xff]
        %v1282 = vld [vmem:[#allocation7 + $0x108] sm:$0xff]
        %v1283 = vld [vmem:[#allocation7 + $0x110] sm:$0xff]
        %v1284 = vld [vmem:[#allocation7 + $0x118] sm:$0xff]
        %v1285 = vld [vmem:[#allocation7 + $0x120] sm:$0xff]
        %v1286 = vld [vmem:[#allocation7 + $0x128] sm:$0xff]
        %v1287 = vld [vmem:[#allocation7 + $0x130] sm:$0xff]
        %v1288 = vld [vmem:[#allocation7 + $0x138] sm:$0xff]
        %v1289 = vld [vmem:[#allocation7 + $0x140] sm:$0xff]
        %v1290 = vld [vmem:[#allocation7 + $0x148] sm:$0xff]
        %v1291 = vld [vmem:[#allocation7 + $0x150] sm:$0xff]
        %v1292 = vld [vmem:[#allocation7 + $0x158] sm:$0xff]
        %v1293 = vld [vmem:[#allocation7 + $0x160] sm:$0xff]
        %v1294 = vld [vmem:[#allocation7 + $0x168] sm:$0xff]
        %v1295 = vld [vmem:[#allocation7 + $0x170] sm:$0xff]
        %v1296 = vld [vmem:[#allocation7 + $0x178] sm:$0xff]
        %v1297 = vld [vmem:[#allocation7 + $0x180] sm:$0xff]
        %v1298 = vld [vmem:[#allocation7 + $0x188] sm:$0xff]
        %v1299 = vld [vmem:[#allocation7 + $0x190] sm:$0xff]
        %v1300 = vld [vmem:[#allocation7 + $0x198] sm:$0xff]
        %v1301 = vld [vmem:[#allocation7 + $0x1a0] sm:$0xff]
        %v1302 = vld [vmem:[#allocation7 + $0x1a8] sm:$0xff]
        %v1303 = vld [vmem:[#allocation7 + $0x1b0] sm:$0xff]
        %v1304 = vld [vmem:[#allocation7 + $0x1b8] sm:$0xff]
        %v1305 = vld [vmem:[#allocation7 + $0x1c0] sm:$0xff]
        %v1306 = vld [vmem:[#allocation7 + $0x1c8] sm:$0xff]
        %v1307 = vld [vmem:[#allocation7 + $0x1d0] sm:$0xff]
        %v1308 = vld [vmem:[#allocation7 + $0x1d8] sm:$0xff]
        %v1309 = vld [vmem:[#allocation7 + $0x1e0] sm:$0xff]
        %v1310 = vld [vmem:[#allocation7 + $0x1e8] sm:$0xff]
        %v1311 = vld [vmem:[#allocation7 + $0x1f0] sm:$0xff]
        %v1312 = vld [vmem:[#allocation7 + $0x1f8] sm:$0xff]
        %v1313 = vld [vmem:[#allocation7 + $0x200] sm:$0xff]
        %v1314 = vld [vmem:[#allocation7 + $0x208] sm:$0xff]
        %v1315 = vld [vmem:[#allocation7 + $0x210] sm:$0xff]
        %v1316 = vld [vmem:[#allocation7 + $0x218] sm:$0xff]
        %v1317 = vld [vmem:[#allocation7 + $0x220] sm:$0xff]
        %v1318 = vld [vmem:[#allocation7 + $0x228] sm:$0xff]
        %v1319 = vld [vmem:[#allocation7 + $0x230] sm:$0xff]
        %v1320 = vld [vmem:[#allocation7 + $0x238] sm:$0xff]
        %v1321 = vld [vmem:[#allocation7 + $0x240] sm:$0xff]
        %v1322 = vld [vmem:[#allocation7 + $0x248] sm:$0xff]
        %v1323 = vld [vmem:[#allocation7 + $0x250] sm:$0xff]
        %v1324 = vld [vmem:[#allocation7 + $0x258] sm:$0xff]
        %v1325 = vld [vmem:[#allocation7 + $0x260] sm:$0xff]
        %v1326 = vld [vmem:[#allocation7 + $0x268] sm:$0xff]
        %v1327 = vld [vmem:[#allocation7 + $0x270] sm:$0xff]
        %v1328 = vld [vmem:[#allocation7 + $0x278] sm:$0xff]
        %v1329 = vld [vmem:[#allocation7 + $0x280] sm:$0xff]
        %v1330 = vld [vmem:[#allocation7 + $0x288] sm:$0xff]
        %v1331 = vld [vmem:[#allocation7 + $0x290] sm:$0xff]
        %v1332 = vld [vmem:[#allocation7 + $0x298] sm:$0xff]
        %v1333 = vld [vmem:[#allocation7 + $0x2a0] sm:$0xff]
        %v1334 = vld [vmem:[#allocation7 + $0x2a8] sm:$0xff]
        %v1335 = vld [vmem:[#allocation7 + $0x2b0] sm:$0xff]
        %v1336 = vld [vmem:[#allocation7 + $0x2b8] sm:$0xff]
        %v1337 = vld [vmem:[#allocation7 + $0x2c0] sm:$0xff]
        %v1338 = vld [vmem:[#allocation7 + $0x2c8] sm:$0xff]
        %v1339 = vld [vmem:[#allocation7 + $0x2d0] sm:$0xff]
        %v1340 = vld [vmem:[#allocation7 + $0x2d8] sm:$0xff]
        %v1341 = vld [vmem:[#allocation7 + $0x2e0] sm:$0xff]
        %v1342 = vld [vmem:[#allocation7 + $0x2e8] sm:$0xff]
        %v1343 = vld [vmem:[#allocation7 + $0x2f0] sm:$0xff]
        %v1344 = vld [vmem:[#allocation7 + $0x2f8] sm:$0xff]
        %v1345 = vld [vmem:[#allocation7 + $0x300] sm:$0xff]
        %v1346 = vld [vmem:[#allocation7 + $0x308] sm:$0xff]
        %v1347 = vld [vmem:[#allocation7 + $0x310] sm:$0xff]
        %v1348 = vld [vmem:[#allocation7 + $0x318] sm:$0xff]
        %v1349 = vld [vmem:[#allocation7 + $0x320] sm:$0xff]
        %v1350 = vld [vmem:[#allocation7 + $0x328] sm:$0xff]
        %v1351 = vld [vmem:[#allocation7 + $0x330] sm:$0xff]
        %v1352 = vld [vmem:[#allocation7 + $0x338] sm:$0xff]
        %v1353 = vld [vmem:[#allocation7 + $0x340] sm:$0xff]
        %v1354 = vld [vmem:[#allocation7 + $0x348] sm:$0xff]
        %v1355 = vld [vmem:[#allocation7 + $0x350] sm:$0xff]
        %v1356 = vld [vmem:[#allocation7 + $0x358] sm:$0xff]
        %v1357 = vld [vmem:[#allocation7 + $0x360] sm:$0xff]
        %v1358 = vld [vmem:[#allocation7 + $0x368] sm:$0xff]
        %v1359 = vld [vmem:[#allocation7 + $0x370] sm:$0xff]
        %v1360 = vld [vmem:[#allocation7 + $0x378] sm:$0xff]
        %v1361 = vld [vmem:[#allocation7 + $0x380] sm:$0xff]
        %v1362 = vld [vmem:[#allocation7 + $0x388] sm:$0xff]
        %v1363 = vld [vmem:[#allocation7 + $0x390] sm:$0xff]
        %v1364 = vld [vmem:[#allocation7 + $0x398] sm:$0xff]
        %v1365 = vld [vmem:[#allocation7 + $0x3a0] sm:$0xff]
        %v1366 = vld [vmem:[#allocation7 + $0x3a8] sm:$0xff]
        %v1367 = vld [vmem:[#allocation7 + $0x3b0] sm:$0xff]
        %v1368 = vld [vmem:[#allocation7 + $0x3b8] sm:$0xff]
        %v1369 = vld [vmem:[#allocation7 + $0x3c0] sm:$0xff]
        %v1370 = vld [vmem:[#allocation7 + $0x3c8] sm:$0xff]
        %v1371 = vld [vmem:[#allocation7 + $0x3d0] sm:$0xff]
        %v1372 = vld [vmem:[#allocation7 + $0x3d8] sm:$0xff]
        %v1373 = vld [vmem:[#allocation7 + $0x3e0] sm:$0xff]
        %v1374 = vld [vmem:[#allocation7 + $0x3e8] sm:$0xff]
        %v1375 = vld [vmem:[#allocation7 + $0x3f0] sm:$0xff]
        %v1376 = vld [vmem:[#allocation7 + $0x3f8] sm:$0xff]
        %v1377 = vld [vmem:[#allocation7 + $0x400] sm:$0xff]
        %v1378 = vld [vmem:[#allocation7 + $0x408] sm:$0xff]
        %v1379 = vld [vmem:[#allocation7 + $0x410] sm:$0xff]
        %v1380 = vld [vmem:[#allocation7 + $0x418] sm:$0xff]
        %v1381 = vld [vmem:[#allocation7 + $0x420] sm:$0xff]
        %v1382 = vld [vmem:[#allocation7 + $0x428] sm:$0xff]
        %v1383 = vld [vmem:[#allocation7 + $0x430] sm:$0xff]
        %v1384 = vld [vmem:[#allocation7 + $0x438] sm:$0xff]
        %v1385 = vld [vmem:[#allocation7 + $0x440] sm:$0xff]
        %v1386 = vld [vmem:[#allocation7 + $0x448] sm:$0xff]
        %v1387 = vld [vmem:[#allocation7 + $0x450] sm:$0xff]
        %v1388 = vld [vmem:[#allocation7 + $0x458] sm:$0xff]
        %v1389 = vld [vmem:[#allocation7 + $0x460] sm:$0xff]
        %v1390 = vld [vmem:[#allocation7 + $0x468] sm:$0xff]
        %v1391 = vld [vmem:[#allocation7 + $0x470] sm:$0xff]
        %v1392 = vld [vmem:[#allocation7 + $0x478] sm:$0xff]
        %v1393 = vld [vmem:[%s14] sm:$0x7]
        %v1395 = vperm.slane %v1393, 0
        %v1396 = vperm.slane %v1393, 1
        %v1397 = vperm.slane %v1393, 2
        %1401 = vmatpush.msra.mxu0 %v1294
        %1402 = vmatpush.msra.mxu0 %v1291
        %1403 = vmatpush.msra.mxu0 %v1288
        %1404 = vmatpush.msra.mxu0 %v1285
        %1405 = vmatpush.msra.mxu0 %v1282
        %1406 = vmatpush.msra.mxu0 %v1279
        %1407 = vmatpush.msra.mxu0 %v1276
        %1408 = vmatpush.msra.mxu0 %v1273
        %1409 = vmatpush.msra.mxu0 %v1270
        %1410 = vmatpush.msra.mxu0 %v1267
        %1411 = vmatpush.msra.mxu0 %v1264
        %1412 = vmatpush.msra.mxu0 %v1261
        %1413 = vmatpush.msra.mxu0 %v1258
        %1414 = vmatpush.msra.mxu0 %v1255
        %1415 = vmatpush.msra.mxu0 %v1252
        %1416 = vmatpush.msra.mxu0 %v1249
        %1417 = vmatmul.f32.gmra.mxu0 %v1237
        %v1418 = vpop.f32.mrf.mxu0
        %v1419 = vadd.f32 %v1395, %v1418
        %1420 = vmatmul.f32.gmra.mxu0 %v1240
        %v1421 = vpop.f32.mrf.mxu0
        %v1422 = vadd.f32 %v1395, %v1421
        %1423 = vmatmul.f32.gmra.mxu0 %v1243
        %v1424 = vpop.f32.mrf.mxu0
        %v1425 = vadd.f32 %v1395, %v1424
        %1426 = vmatmul.f32.gmra.mxu0 %v1246
        %v1427 = vpop.f32.mrf.mxu0
        %v1428 = vadd.f32 %v1395, %v1427
        %1429 = vdwg.mxu0
        %1430 = vmatpush.msra.mxu0 %v1342
        %1431 = vmatpush.msra.mxu0 %v1339
        %1432 = vmatpush.msra.mxu0 %v1336
        %1433 = vmatpush.msra.mxu0 %v1333
        %1434 = vmatpush.msra.mxu0 %v1330
        %1435 = vmatpush.msra.mxu0 %v1327
        %1436 = vmatpush.msra.mxu0 %v1324
        %1437 = vmatpush.msra.mxu0 %v1321
        %1438 = vmatpush.msra.mxu0 %v1318
        %1439 = vmatpush.msra.mxu0 %v1315
        %1440 = vmatpush.msra.mxu0 %v1312
        %1441 = vmatpush.msra.mxu0 %v1309
        %1442 = vmatpush.msra.mxu0 %v1306
        %1443 = vmatpush.msra.mxu0 %v1303
        %1444 = vmatpush.msra.mxu0 %v1300
        %1445 = vmatpush.msra.mxu0 %v1297
        %1446 = vmatmul.f32.gmra.mxu0 %v1238
        %v1447 = vpop.f32.mrf.mxu0
        %v1448 = vadd.f32 %v1419, %v1447
        %1449 = vmatmul.f32.gmra.mxu0 %v1241
        %v1450 = vpop.f32.mrf.mxu0
        %v1451 = vadd.f32 %v1422, %v1450
        %1452 = vmatmul.f32.gmra.mxu0 %v1244
        %v1453 = vpop.f32.mrf.mxu0
        %v1454 = vadd.f32 %v1425, %v1453
        %1455 = vmatmul.f32.gmra.mxu0 %v1247
        %v1456 = vpop.f32.mrf.mxu0
        %v1457 = vadd.f32 %v1428, %v1456
        %1458 = vdwg.mxu0
        %1459 = vmatpush.msra.mxu0 %v1390
        %1460 = vmatpush.msra.mxu0 %v1387
        %1461 = vmatpush.msra.mxu0 %v1384
        %1462 = vmatpush.msra.mxu0 %v1381
        %1463 = vmatpush.msra.mxu0 %v1378
        %1464 = vmatpush.msra.mxu0 %v1375
        %1465 = vmatpush.msra.mxu0 %v1372
        %1466 = vmatpush.msra.mxu0 %v1369
        %1467 = vmatpush.msra.mxu0 %v1366
        %1468 = vmatpush.msra.mxu0 %v1363
        %1469 = vmatpush.msra.mxu0 %v1360
        %1470 = vmatpush.msra.mxu0 %v1357
        %1471 = vmatpush.msra.mxu0 %v1354
        %1472 = vmatpush.msra.mxu0 %v1351
        %1473 = vmatpush.msra.mxu0 %v1348
        %1474 = vmatpush.msra.mxu0 %v1345
        %1475 = vmatmul.f32.gmra.mxu0 %v1239
        %v1476 = vpop.f32.mrf.mxu0
        %v1477 = vadd.f32 %v1448, %v1476
        %1478 = vmatmul.f32.gmra.mxu0 %v1242
        %v1479 = vpop.f32.mrf.mxu0
        %v1480 = vadd.f32 %v1451, %v1479
        %1481 = vmatmul.f32.gmra.mxu0 %v1245
        %v1482 = vpop.f32.mrf.mxu0
        %v1483 = vadd.f32 %v1454, %v1482
        %1484 = vmatmul.f32.gmra.mxu0 %v1248
        %v1485 = vpop.f32.mrf.mxu0
        %v1486 = vadd.f32 %v1457, %v1485
        %1487 = vdwg.mxu0
        %1488 = vmatpush.msra.mxu0 %v1295
        %1489 = vmatpush.msra.mxu0 %v1292
        %1490 = vmatpush.msra.mxu0 %v1289
        %1491 = vmatpush.msra.mxu0 %v1286
        %1492 = vmatpush.msra.mxu0 %v1283
        %1493 = vmatpush.msra.mxu0 %v1280
        %1494 = vmatpush.msra.mxu0 %v1277
        %1495 = vmatpush.msra.mxu0 %v1274
        %1496 = vmatpush.msra.mxu0 %v1271
        %1497 = vmatpush.msra.mxu0 %v1268
        %1498 = vmatpush.msra.mxu0 %v1265
        %1499 = vmatpush.msra.mxu0 %v1262
        %1500 = vmatpush.msra.mxu0 %v1259
        %1501 = vmatpush.msra.mxu0 %v1256
        %1502 = vmatpush.msra.mxu0 %v1253
        %1503 = vmatpush.msra.mxu0 %v1250
        %1504 = vmatmul.f32.gmra.mxu0 %v1237
        %v1505 = vpop.f32.mrf.mxu0
        %v1506 = vadd.f32 %v1396, %v1505
        %1507 = vmatmul.f32.gmra.mxu0 %v1240
        %v1508 = vpop.f32.mrf.mxu0
        %v1509 = vadd.f32 %v1396, %v1508
        %1510 = vmatmul.f32.gmra.mxu0 %v1243
        %v1511 = vpop.f32.mrf.mxu0
        %v1512 = vadd.f32 %v1396, %v1511
        %1513 = vmatmul.f32.gmra.mxu0 %v1246
        %v1514 = vpop.f32.mrf.mxu0
        %v1515 = vadd.f32 %v1396, %v1514
        %1516 = vdwg.mxu0
        %1517 = vmatpush.msra.mxu0 %v1343
        %1518 = vmatpush.msra.mxu0 %v1340
        %1519 = vmatpush.msra.mxu0 %v1337
        %1520 = vmatpush.msra.mxu0 %v1334
        %1521 = vmatpush.msra.mxu0 %v1331
        %1522 = vmatpush.msra.mxu0 %v1328
        %1523 = vmatpush.msra.mxu0 %v1325
        %1524 = vmatpush.msra.mxu0 %v1322
        %1525 = vmatpush.msra.mxu0 %v1319
        %1526 = vmatpush.msra.mxu0 %v1316
        %1527 = vmatpush.msra.mxu0 %v1313
        %1528 = vmatpush.msra.mxu0 %v1310
        %1529 = vmatpush.msra.mxu0 %v1307
        %1530 = vmatpush.msra.mxu0 %v1304
        %1531 = vmatpush.msra.mxu0 %v1301
        %1532 = vmatpush.msra.mxu0 %v1298
        %1533 = vmatmul.f32.gmra.mxu0 %v1238
        %v1534 = vpop.f32.mrf.mxu0
        %v1535 = vadd.f32 %v1506, %v1534
        %1536 = vmatmul.f32.gmra.mxu0 %v1241
        %v1537 = vpop.f32.mrf.mxu0
        %v1538 = vadd.f32 %v1509, %v1537
        %1539 = vmatmul.f32.gmra.mxu0 %v1244
        %v1540 = vpop.f32.mrf.mxu0
        %v1541 = vadd.f32 %v1512, %v1540
        %1542 = vmatmul.f32.gmra.mxu0 %v1247
        %v1543 = vpop.f32.mrf.mxu0
        %v1544 = vadd.f32 %v1515, %v1543
        %1545 = vdwg.mxu0
        %1546 = vmatpush.msra.mxu0 %v1391
        %1547 = vmatpush.msra.mxu0 %v1388
        %1548 = vmatpush.msra.mxu0 %v1385
        %1549 = vmatpush.msra.mxu0 %v1382
        %1550 = vmatpush.msra.mxu0 %v1379
        %1551 = vmatpush.msra.mxu0 %v1376
        %1552 = vmatpush.msra.mxu0 %v1373
        %1553 = vmatpush.msra.mxu0 %v1370
        %1554 = vmatpush.msra.mxu0 %v1367
        %1555 = vmatpush.msra.mxu0 %v1364
        %1556 = vmatpush.msra.mxu0 %v1361
        %1557 = vmatpush.msra.mxu0 %v1358
        %1558 = vmatpush.msra.mxu0 %v1355
        %1559 = vmatpush.msra.mxu0 %v1352
        %1560 = vmatpush.msra.mxu0 %v1349
        %1561 = vmatpush.msra.mxu0 %v1346
        %1562 = vmatmul.f32.gmra.mxu0 %v1239
        %v1563 = vpop.f32.mrf.mxu0
        %v1564 = vadd.f32 %v1535, %v1563
        %1565 = vmatmul.f32.gmra.mxu0 %v1242
        %v1566 = vpop.f32.mrf.mxu0
        %v1567 = vadd.f32 %v1538, %v1566
        %1568 = vmatmul.f32.gmra.mxu0 %v1245
        %v1569 = vpop.f32.mrf.mxu0
        %v1570 = vadd.f32 %v1541, %v1569
        %1571 = vmatmul.f32.gmra.mxu0 %v1248
        %v1572 = vpop.f32.mrf.mxu0
        %v1573 = vadd.f32 %v1544, %v1572
        %1574 = vdwg.mxu0
        %1575 = vmatpush.msra.mxu0 %v1296
        %1576 = vmatpush.msra.mxu0 %v1293
        %1577 = vmatpush.msra.mxu0 %v1290
        %1578 = vmatpush.msra.mxu0 %v1287
        %1579 = vmatpush.msra.mxu0 %v1284
        %1580 = vmatpush.msra.mxu0 %v1281
        %1581 = vmatpush.msra.mxu0 %v1278
        %1582 = vmatpush.msra.mxu0 %v1275
        %1583 = vmatpush.msra.mxu0 %v1272
        %1584 = vmatpush.msra.mxu0 %v1269
        %1585 = vmatpush.msra.mxu0 %v1266
        %1586 = vmatpush.msra.mxu0 %v1263
        %1587 = vmatpush.msra.mxu0 %v1260
        %1588 = vmatpush.msra.mxu0 %v1257
        %1589 = vmatpush.msra.mxu0 %v1254
        %1590 = vmatpush.msra.mxu0 %v1251
        %1591 = vmatmul.f32.gmra.mxu0 %v1237
        %v1592 = vpop.f32.mrf.mxu0
        %v1593 = vadd.f32 %v1397, %v1592
        %1594 = vmatmul.f32.gmra.mxu0 %v1240
        %v1595 = vpop.f32.mrf.mxu0
        %v1596 = vadd.f32 %v1397, %v1595
        %1597 = vmatmul.f32.gmra.mxu0 %v1243
        %v1598 = vpop.f32.mrf.mxu0
        %v1599 = vadd.f32 %v1397, %v1598
        %1600 = vmatmul.f32.gmra.mxu0 %v1246
        %v1601 = vpop.f32.mrf.mxu0
        %v1602 = vadd.f32 %v1397, %v1601
        %1603 = vdwg.mxu0
        %1604 = vmatpush.msra.mxu0 %v1344
        %1605 = vmatpush.msra.mxu0 %v1341
        %1606 = vmatpush.msra.mxu0 %v1338
        %1607 = vmatpush.msra.mxu0 %v1335
        %1608 = vmatpush.msra.mxu0 %v1332
        %1609 = vmatpush.msra.mxu0 %v1329
        %1610 = vmatpush.msra.mxu0 %v1326
        %1611 = vmatpush.msra.mxu0 %v1323
        %1612 = vmatpush.msra.mxu0 %v1320
        %1613 = vmatpush.msra.mxu0 %v1317
        %1614 = vmatpush.msra.mxu0 %v1314
        %1615 = vmatpush.msra.mxu0 %v1311
        %1616 = vmatpush.msra.mxu0 %v1308
        %1617 = vmatpush.msra.mxu0 %v1305
        %1618 = vmatpush.msra.mxu0 %v1302
        %1619 = vmatpush.msra.mxu0 %v1299
        %1620 = vmatmul.f32.gmra.mxu0 %v1238
        %v1621 = vpop.f32.mrf.mxu0
        %v1622 = vadd.f32 %v1593, %v1621
        %1623 = vmatmul.f32.gmra.mxu0 %v1241
        %v1624 = vpop.f32.mrf.mxu0
        %v1625 = vadd.f32 %v1596, %v1624
        %1626 = vmatmul.f32.gmra.mxu0 %v1244
        %v1627 = vpop.f32.mrf.mxu0
        %v1628 = vadd.f32 %v1599, %v1627
        %1629 = vmatmul.f32.gmra.mxu0 %v1247
        %v1630 = vpop.f32.mrf.mxu0
        %v1631 = vadd.f32 %v1602, %v1630
        %1632 = vdwg.mxu0
        %1633 = vmatpush.msra.mxu0 %v1392
        %1634 = vmatpush.msra.mxu0 %v1389
        %1635 = vmatpush.msra.mxu0 %v1386
        %1636 = vmatpush.msra.mxu0 %v1383
        %1637 = vmatpush.msra.mxu0 %v1380
        %1638 = vmatpush.msra.mxu0 %v1377
        %1639 = vmatpush.msra.mxu0 %v1374
        %1640 = vmatpush.msra.mxu0 %v1371
        %1641 = vmatpush.msra.mxu0 %v1368
        %1642 = vmatpush.msra.mxu0 %v1365
        %1643 = vmatpush.msra.mxu0 %v1362
        %1644 = vmatpush.msra.mxu0 %v1359
        %1645 = vmatpush.msra.mxu0 %v1356
        %1646 = vmatpush.msra.mxu0 %v1353
        %1647 = vmatpush.msra.mxu0 %v1350
        %1648 = vmatpush.msra.mxu0 %v1347
        %1649 = vmatmul.f32.gmra.mxu0 %v1239
        %v1650 = vpop.f32.mrf.mxu0
        %v1651 = vadd.f32 %v1622, %v1650
        %1652 = vmatmul.f32.gmra.mxu0 %v1242
        %v1653 = vpop.f32.mrf.mxu0
        %v1654 = vadd.f32 %v1625, %v1653
        %1655 = vmatmul.f32.gmra.mxu0 %v1245
        %v1656 = vpop.f32.mrf.mxu0
        %v1657 = vadd.f32 %v1628, %v1656
        %1658 = vmatmul.f32.gmra.mxu0 %v1248
        %v1659 = vpop.f32.mrf.mxu0
        %v1660 = vadd.f32 %v1631, %v1659
        %1661 = vdwg.mxu0
        %1662 = vst [vmem:[%s578] sm:$0xff] %v1477
        %1663 = vst [vmem:[%s578 + $0x8] sm:$0xff] %v1564
        %1664 = vst [vmem:[%s578 + $0x10] sm:$0xff] %v1651
        %1665 = vst [vmem:[%s578 + $0x18] sm:$0xff] %v1480
        %1666 = vst [vmem:[%s578 + $0x20] sm:$0xff] %v1567
        %1667 = vst [vmem:[%s578 + $0x28] sm:$0xff] %v1654
        %1668 = vst [vmem:[%s578 + $0x30] sm:$0xff] %v1483
        %1669 = vst [vmem:[%s578 + $0x38] sm:$0xff] %v1570
        %1670 = vst [vmem:[%s578 + $0x40] sm:$0xff] %v1657
        %1671 = vst [vmem:[%s578 + $0x48] sm:$0xff] %v1486
        %1672 = vst [vmem:[%s578 + $0x50] sm:$0xff] %v1573
        %1673 = vst [vmem:[%s578 + $0x58] sm:$0xff] %v1660
        %p1674 = scmp.lt.s32.totalorder %s29, 1
        %s1675 = scalar_select %p1674, %s29, 1
        %s1676 = smul.addr %s1675, 12
        %s1677 = smul.addr %s1676, 8
        %s1678 = scalar_lea.vmem %s15, %s1677
        // Predicated region
        $region97: #{model_forward.1} parent=79 // pred_check
          %p1679 = pneg %p372
        $region98: #{model_forward.1} parent=79 // pred_check_branch
          %1681 = sbr.rel (%p1679) target = $region100
        $region99: #{model_forward.1} parent=79 // pred_region
          _
        $region100: #{model_forward.1} parent=79 // pred_fallthru
          _
      $region80: #{model_forward.1} parent=5 // pred_fallthru
        _
      %p1682 = scmp.le.s32.totalorder 2, %s24
      // Predicated region
      $region101: #{model_forward.1} parent=5 // pred_check
        %p1683 = pneg %p1682
      $region102: #{model_forward.1} parent=5 // pred_check_branch
        %1685 = sbr.rel (%p1683) target = $region104
      $region103: #{model_forward.1} parent=5 // pred_region
        %s1686 = ssub.s32 %s24, 2
        // Predicated region
        $region105: #{model_forward.1} parent=103 // pred_check
          %p1687 = pneg %p378
        $region106: #{model_forward.1} parent=103 // pred_check_branch
          %1689 = sbr.rel (%p1687) target = $region108
        $region107: #{model_forward.1} parent=103 // pred_region
          %p1690 = scmp.lt.s32.totalorder %s30, 1
          %s1691 = scalar_select %p1690, %s30, 1
          %s1692 = smul.addr %s1691, 12
          %s1693 = smul.addr %s1692, 8
          %s1694 = scalar_lea.vmem %s15, %s1693
        $region108: #{model_forward.1} parent=103 // pred_fallthru
          _
      $region104: #{model_forward.1} parent=5 // pred_fallthru
        _
    $region6: #{model_forward.1} parent=1 // loop_footer
      %s28 = sadd.s32 1, %s24
    $region7: #{model_forward.1} parent=1 // loop_footer_branch
      %23 = sbr.rel target = $region3
    $region8: #{model_forward.1} parent=1 // loop_exit
      _
    %1695 = vsyncpa [#allocation3], 1
    %s1696 = scalar_lea.sflag [#allocation3], 1
    %1697 = vsyncpa %s1696, 1
    %1698 = vsyncpa [#allocation5], 1
    %1699 = vsyncpa [#allocation8], 1

</llo_original>
